<compile_context>
chip_gen: v7x
topology: tpu7x:2x2x1
jax: 0.10.0
libtpu: 0.0.40
codegen_flags: <defaults>
</compile_context>

<pallas_src>
import jax
import jax.numpy as jnp
import numpy as np
from jax.experimental import pallas as pl
from jax.experimental.pallas import tpu as pltpu

K = 5    # tap count of the 5-wide convolutions
PAD = 2  # padding=2


def unet_kernel(x_ref, w0_ref, b0_ref,
                w1_ref, b1_ref, w2_ref, b2_ref, w3_ref, b3_ref,
                wu2_ref, bu2_ref, wu1_ref, bu1_ref, out_ref):
    f32 = jnp.float32
    bf16 = jnp.bfloat16
    Bt, L, _ = x_ref.shape
    H = w0_ref.shape[1]

    def conv5(x, w_ref, b_ref):
        # x: (Bt, Lc, Cin) f32; w_ref: (K*Cin, Cout) bf16; b_ref: (1, Cout) f32
        bt, lc, cin = x.shape
        cout = w_ref.shape[1]
        zpad = jnp.zeros((bt, PAD, cin), f32)
        xpad = jnp.concatenate([zpad, x, zpad], axis=1)        # (Bt, Lc+4, Cin)
        # K shifted views (static sublane slices), stacked on lanes -> one matmul
        taps = [xpad[:, k:k + lc, :] for k in range(K)]
        stacked = jnp.concatenate(taps, axis=-1)               # (Bt, Lc, K*Cin)
        stacked = stacked.reshape(bt * lc, K * cin).astype(bf16)
        y = jnp.dot(stacked, w_ref[...], preferred_element_type=f32)
        y = y + b_ref[...]                                     # f32 bias
        return y.reshape(bt, lc, cout)

    def maxpool2(x):
        # MaxPool1d(kernel=2, stride=2) along the length (sublane) axis.
        bt, lc, c = x.shape
        return jnp.max(x.reshape(bt, lc // 2, 2, c), axis=2)

    def upsample2(x):
        # nearest-neighbour exact 2x: out[2i] = out[2i+1] = in[i]
        bt, lc, c = x.shape
        return jnp.broadcast_to(x[:, :, None, :], (bt, lc, 2, c)).reshape(bt, 2 * lc, c)

    x = x_ref[...].astype(f32)                                        # (Bt, L, Cin)
    xe = jnp.dot(x.reshape(Bt * L, -1).astype(bf16), w0_ref[...],
                 preferred_element_type=f32) + b0_ref[...]            # entry 1x1 conv
    xe = xe.reshape(Bt, L, H)
    d1 = maxpool2(conv5(xe, w1_ref, b1_ref))                          # (Bt, L/2, H)
    d2 = maxpool2(conv5(d1, w2_ref, b2_ref))                          # (Bt, L/4, H)
    d3 = conv5(d2, w3_ref, b3_ref)                                    # (Bt, L/4, H)
    u2 = conv5(upsample2(d3) + d1, wu2_ref, bu2_ref)                  # (Bt, L/2, H)
    u1 = conv5(upsample2(u2) + xe, wu1_ref, bu1_ref)                  # (Bt, L, Cout)
    out_ref[...] = jax.nn.sigmoid(u1).astype(out_ref.dtype)


def _pick_batch_tile(n, max_tile=8):
    # Fold several batch elements into one grid step (tall-M matmuls), while
    # keeping >= 2 grid steps so both v7x TensorCores get a share of the batch.
    if n <= 1:
        return 1
    for bt in range(min(max_tile, n // 2), 0, -1):
        if n % bt == 0:
            return bt
    return 1


def unet_pallas(x_ncl, params, *, batch_tile=None):
    """x_ncl: (N, in_channel, L) float32, PyTorch Conv1d layout."""
    N, cin, L = x_ncl.shape
    assert L % 4 == 0, "two 2x max-pools require L divisible by 4"
    H = params["w1"].shape[0]
    cout = params["wu1"].shape[0]

    if batch_tile is None:
        batch_tile = _pick_batch_tile(N)
    assert N % batch_tile == 0
    grid_n = N // batch_tile

    x_nlc = jnp.transpose(x_ncl, (0, 2, 1)).astype(jnp.float32)

    bf16 = jnp.bfloat16

    # torch conv weights (Cout, Cin, K) -> (K*Cin, Cout) bf16, ordering matching
    # the in-kernel tap stacking (k-major, cin-minor).
    def wk(w):
        co, ci, k = w.shape
        return jnp.transpose(w, (2, 1, 0)).reshape(k * ci, co).astype(bf16)

    w0 = jnp.transpose(params["w0"][:, :, 0], (1, 0)).astype(bf16)  # (Cin, H)
    f32 = jnp.float32
    args = (
        x_nlc,
        w0, params["b0"].reshape(1, H).astype(f32),
        wk(params["w1"]), params["b1"].reshape(1, H).astype(f32),
        wk(params["w2"]), params["b2"].reshape(1, H).astype(f32),
        wk(params["w3"]), params["b3"].reshape(1, H).astype(f32),
        wk(params["wu2"]), params["bu2"].reshape(1, H).astype(f32),
        wk(params["wu1"]), params["bu1"].reshape(1, cout).astype(f32),
    )

    def full_spec(a):
        nd = a.ndim
        return pl.BlockSpec(a.shape, lambda n, _nd=nd: (0,) * _nd)

    in_specs = [pl.BlockSpec((batch_tile, L, cin), lambda n: (n, 0, 0))]
    in_specs += [full_spec(a) for a in args[1:]]

    # Advisory cost hint for the XLA scheduler.
    flops = 2 * N * L * cin * H                       # entry 1x1 conv
    flops += 2 * N * L * (K * H) * H                  # down1
    flops += 2 * N * (L // 2) * (K * H) * H           # down2
    flops += 2 * N * (L // 4) * (K * H) * H           # down3
    flops += 2 * N * (L // 2) * (K * H) * H           # up2
    flops += 2 * N * L * (K * H) * cout               # up1
    param_bytes = sum(int(a.size) * a.dtype.itemsize for a in args[1:])
    cost = pl.CostEstimate(
        flops=int(flops),
        transcendentals=int(N * L * cout),
        bytes_accessed=int(x_nlc.size * 4 + N * L * cout * 4 + grid_n * param_bytes),
    )

    out_nlc = pl.pallas_call(
        unet_kernel,
        out_shape=jax.ShapeDtypeStruct((N, L, cout), jnp.float32),
        grid=(grid_n,),
        in_specs=in_specs,
        out_specs=pl.BlockSpec((batch_tile, L, cout), lambda n: (n, 0, 0)),
        compiler_params=pltpu.CompilerParams(dimension_semantics=("parallel",)),
        cost_estimate=cost,
    )(*args)
    return jnp.transpose(out_nlc, (0, 2, 1))  # back to (N, Cout, L)


# ----------------------------- reference (plain JAX) -----------------------------
def _conv1d_ref(x, w, b, pad):
    out = jax.lax.conv_general_dilated(
        x, w, window_strides=(1,), padding=[(pad, pad)],
        dimension_numbers=("NCH", "OIH", "NCH"))
    return out + b[None, :, None]


def unet_ref(x, p):
    def pool(v):
        return jax.lax.reduce_window(v, -jnp.inf, jax.lax.max,
                                     (1, 1, 2), (1, 1, 2), "VALID")
    xe = _conv1d_ref(x, p["w0"], p["b0"], 0)
    d1 = pool(_conv1d_ref(xe, p["w1"], p["b1"], 2))
    d2 = pool(_conv1d_ref(d1, p["w2"], p["b2"], 2))
    d3 = _conv1d_ref(d2, p["w3"], p["b3"], 2)
    u2 = _conv1d_ref(jnp.repeat(d3, 2, axis=-1) + d1, p["wu2"], p["bu2"], 2)
    u1 = _conv1d_ref(jnp.repeat(u2, 2, axis=-1) + xe, p["wu1"], p["bu1"], 2)
    return jax.nn.sigmoid(u1)


def init_params(key, cin, cout, hidden):
    ks = jax.random.split(key, 12)

    def w(k, shape, fan_in):
        return jax.random.normal(k, shape, jnp.float32) / np.sqrt(float(fan_in))

    def b(k, n):
        return 0.1 * jax.random.normal(k, (n,), jnp.float32)

    return {
        "w0": w(ks[0], (hidden, cin, 1), cin),         "b0": b(ks[1], hidden),
        "w1": w(ks[2], (hidden, hidden, 5), hidden*5), "b1": b(ks[3], hidden),
        "w2": w(ks[4], (hidden, hidden, 5), hidden*5), "b2": b(ks[5], hidden),
        "w3": w(ks[6], (hidden, hidden, 5), hidden*5), "b3": b(ks[7], hidden),
        "wu2": w(ks[8], (hidden, hidden, 5), hidden*5), "bu2": b(ks[9], hidden),
        "wu1": w(ks[10], (cout, hidden, 5), hidden*5),  "bu1": b(ks[11], cout),
    }


if __name__ == "__main__":
    key = jax.random.PRNGKey(0)
    kx, kp = jax.random.split(key)

    N, cin, cout, hidden, L = 2, 4, 4, 32, 16
    x = jax.random.normal(kx, (N, cin, L), jnp.float32)
    params = init_params(kp, cin, cout, hidden)

    out = jax.block_until_ready(unet_pallas(x, params))
    ref = jax.block_until_ready(unet_ref(x, params))
    # bf16 MXU inputs with f32 accumulation; sigmoid output => 2e-2 is ample.
    np.testing.assert_allclose(np.asarray(out), np.asarray(ref), atol=2e-2, rtol=2e-2)
    print("KERNEL_OK")
</pallas_src>

<mosaic_0001>
module attributes {stable_mosaic.version = 11 : i64} {
  func.func @unet_kernel(%arg0: i32, %arg1: memref<1x16x4xf32, #tpu.memory_space<vmem>>, %arg2: memref<4x32xbf16, #tpu.memory_space<vmem>>, %arg3: memref<1x32xf32, #tpu.memory_space<vmem>>, %arg4: memref<160x32xbf16, #tpu.memory_space<vmem>>, %arg5: memref<1x32xf32, #tpu.memory_space<vmem>>, %arg6: memref<160x32xbf16, #tpu.memory_space<vmem>>, %arg7: memref<1x32xf32, #tpu.memory_space<vmem>>, %arg8: memref<160x32xbf16, #tpu.memory_space<vmem>>, %arg9: memref<1x32xf32, #tpu.memory_space<vmem>>, %arg10: memref<160x32xbf16, #tpu.memory_space<vmem>>, %arg11: memref<1x32xf32, #tpu.memory_space<vmem>>, %arg12: memref<160x4xbf16, #tpu.memory_space<vmem>>, %arg13: memref<1x4xf32, #tpu.memory_space<vmem>>, %arg14: memref<1x16x4xf32, #tpu.memory_space<vmem>>) attributes {dimension_semantics = [#tpu.dimension_semantics<parallel>], iteration_bounds = array<i64: 2>, scalar_prefetch = 0 : i64, scratch_operands = 0 : i64, tpu.core_type = #tpu.core_type<tc>, window_params = [{transform_indices = @transform_0, window_bounds = array<i64: 1, 16, 4>}, {pipeline_mode = #tpu.pipeline_mode<synchronous>, transform_indices = @transform_1, window_bounds = array<i64: 4, 32>}, {pipeline_mode = #tpu.pipeline_mode<synchronous>, transform_indices = @transform_2, window_bounds = array<i64: 1, 32>}, {pipeline_mode = #tpu.pipeline_mode<synchronous>, transform_indices = @transform_3, window_bounds = array<i64: 160, 32>}, {pipeline_mode = #tpu.pipeline_mode<synchronous>, transform_indices = @transform_4, window_bounds = array<i64: 1, 32>}, {pipeline_mode = #tpu.pipeline_mode<synchronous>, transform_indices = @transform_5, window_bounds = array<i64: 160, 32>}, {pipeline_mode = #tpu.pipeline_mode<synchronous>, transform_indices = @transform_6, window_bounds = array<i64: 1, 32>}, {pipeline_mode = #tpu.pipeline_mode<synchronous>, transform_indices = @transform_7, window_bounds = array<i64: 160, 32>}, {pipeline_mode = #tpu.pipeline_mode<synchronous>, transform_indices = @transform_8, window_bounds = array<i64: 1, 32>}, {pipeline_mode = #tpu.pipeline_mode<synchronous>, transform_indices = @transform_9, window_bounds = array<i64: 160, 32>}, {pipeline_mode = #tpu.pipeline_mode<synchronous>, transform_indices = @transform_10, window_bounds = array<i64: 1, 32>}, {pipeline_mode = #tpu.pipeline_mode<synchronous>, transform_indices = @transform_11, window_bounds = array<i64: 160, 4>}, {pipeline_mode = #tpu.pipeline_mode<synchronous>, transform_indices = @transform_12, window_bounds = array<i64: 1, 4>}, {transform_indices = @transform_13, window_bounds = array<i64: 1, 16, 4>}]} {
    %c0 = arith.constant 0 : index
    %c0_0 = arith.constant 0 : index
    %c0_1 = arith.constant 0 : index
    %0 = vector.load %arg1[%c0, %c0_0, %c0_1] : memref<1x16x4xf32, #tpu.memory_space<vmem>>, vector<1x16x4xf32>
    %1 = vector.shape_cast %0 : vector<1x16x4xf32> to vector<16x4xf32>
    %2 = arith.truncf %1 : vector<16x4xf32> to vector<16x4xbf16>
    %c0_2 = arith.constant 0 : index
    %c0_3 = arith.constant 0 : index
    %3 = vector.load %arg2[%c0_2, %c0_3] : memref<4x32xbf16, #tpu.memory_space<vmem>>, vector<4x32xbf16>
    %cst = arith.constant dense<0.000000e+00> : vector<16x32xf32>
    %4 = tpu.matmul %2, %3, %cst {dimension_numbers = #tpu.dot_dimension_numbers<[1], [0], [0], [1], [0, 0, 1, 1], [], []>} : vector<16x4xbf16>, vector<4x32xbf16>, vector<16x32xf32> -> vector<16x32xf32>
    %c0_4 = arith.constant 0 : index
    %c0_5 = arith.constant 0 : index
    %5 = vector.load %arg3[%c0_4, %c0_5] : memref<1x32xf32, #tpu.memory_space<vmem>>, vector<1x32xf32>
    %6 = vector.broadcast %5 : vector<1x32xf32> to vector<16x32xf32>
    %7 = arith.addf %4, %6 : vector<16x32xf32>
    %8 = vector.shape_cast %7 : vector<16x32xf32> to vector<1x16x32xf32>
    %cst_6 = arith.constant 0.000000e+00 : f32
    %9 = vector.broadcast %cst_6 : f32 to vector<1x2x32xf32>
    %10 = tpu.concatenate %9, %8, %9 in 1 : vector<1x2x32xf32>, vector<1x16x32xf32>, vector<1x2x32xf32> -> vector<1x20x32xf32>
    %11 = vector.extract_strided_slice %10 {offsets = [0, 0, 0], sizes = [1, 16, 32], strides = [1, 1, 1]} : vector<1x20x32xf32> to vector<1x16x32xf32>
    %12 = vector.extract_strided_slice %10 {offsets = [0, 1, 0], sizes = [1, 16, 32], strides = [1, 1, 1]} : vector<1x20x32xf32> to vector<1x16x32xf32>
    %13 = vector.extract_strided_slice %10 {offsets = [0, 2, 0], sizes = [1, 16, 32], strides = [1, 1, 1]} : vector<1x20x32xf32> to vector<1x16x32xf32>
    %14 = vector.extract_strided_slice %10 {offsets = [0, 3, 0], sizes = [1, 16, 32], strides = [1, 1, 1]} : vector<1x20x32xf32> to vector<1x16x32xf32>
    %15 = vector.extract_strided_slice %10 {offsets = [0, 4, 0], sizes = [1, 16, 32], strides = [1, 1, 1]} : vector<1x20x32xf32> to vector<1x16x32xf32>
    %16 = tpu.concatenate %11, %12, %13, %14, %15 in 2 : vector<1x16x32xf32>, vector<1x16x32xf32>, vector<1x16x32xf32>, vector<1x16x32xf32>, vector<1x16x32xf32> -> vector<1x16x160xf32>
    %17 = vector.shape_cast %16 : vector<1x16x160xf32> to vector<16x160xf32>
    %18 = arith.truncf %17 : vector<16x160xf32> to vector<16x160xbf16>
    %c0_7 = arith.constant 0 : index
    %c0_8 = arith.constant 0 : index
    %19 = vector.load %arg4[%c0_7, %c0_8] : memref<160x32xbf16, #tpu.memory_space<vmem>>, vector<160x32xbf16>
    %cst_9 = arith.constant dense<0.000000e+00> : vector<16x32xf32>
    %20 = tpu.matmul %18, %19, %cst_9 {dimension_numbers = #tpu.dot_dimension_numbers<[1], [0], [0], [1], [0, 0, 1, 1], [], []>} : vector<16x160xbf16>, vector<160x32xbf16>, vector<16x32xf32> -> vector<16x32xf32>
    %c0_10 = arith.constant 0 : index
    %c0_11 = arith.constant 0 : index
    %21 = vector.load %arg5[%c0_10, %c0_11] : memref<1x32xf32, #tpu.memory_space<vmem>>, vector<1x32xf32>
    %22 = vector.broadcast %21 : vector<1x32xf32> to vector<16x32xf32>
    %23 = arith.addf %20, %22 : vector<16x32xf32>
    %24 = vector.shape_cast %23 : vector<16x32xf32> to vector<1x16x32xf32>
    %25 = vector.shape_cast %24 : vector<1x16x32xf32> to vector<1x8x2x32xf32>
    %cst_12 = arith.constant dense<0xFF800000> : vector<1x8x32xf32>
    %26 = vector.multi_reduction <maximumf>, %25, %cst_12 [2] : vector<1x8x2x32xf32> to vector<1x8x32xf32>
    %cst_13 = arith.constant 0.000000e+00 : f32
    %27 = vector.broadcast %cst_13 : f32 to vector<1x2x32xf32>
    %28 = tpu.concatenate %27, %26, %27 in 1 : vector<1x2x32xf32>, vector<1x8x32xf32>, vector<1x2x32xf32> -> vector<1x12x32xf32>
    %29 = vector.extract_strided_slice %28 {offsets = [0, 0, 0], sizes = [1, 8, 32], strides = [1, 1, 1]} : vector<1x12x32xf32> to vector<1x8x32xf32>
    %30 = vector.extract_strided_slice %28 {offsets = [0, 1, 0], sizes = [1, 8, 32], strides = [1, 1, 1]} : vector<1x12x32xf32> to vector<1x8x32xf32>
    %31 = vector.extract_strided_slice %28 {offsets = [0, 2, 0], sizes = [1, 8, 32], strides = [1, 1, 1]} : vector<1x12x32xf32> to vector<1x8x32xf32>
    %32 = vector.extract_strided_slice %28 {offsets = [0, 3, 0], sizes = [1, 8, 32], strides = [1, 1, 1]} : vector<1x12x32xf32> to vector<1x8x32xf32>
    %33 = vector.extract_strided_slice %28 {offsets = [0, 4, 0], sizes = [1, 8, 32], strides = [1, 1, 1]} : vector<1x12x32xf32> to vector<1x8x32xf32>
    %34 = tpu.concatenate %29, %30, %31, %32, %33 in 2 : vector<1x8x32xf32>, vector<1x8x32xf32>, vector<1x8x32xf32>, vector<1x8x32xf32>, vector<1x8x32xf32> -> vector<1x8x160xf32>
    %35 = vector.shape_cast %34 : vector<1x8x160xf32> to vector<8x160xf32>
    %36 = arith.truncf %35 : vector<8x160xf32> to vector<8x160xbf16>
    %c0_14 = arith.constant 0 : index
    %c0_15 = arith.constant 0 : index
    %37 = vector.load %arg6[%c0_14, %c0_15] : memref<160x32xbf16, #tpu.memory_space<vmem>>, vector<160x32xbf16>
    %cst_16 = arith.constant dense<0.000000e+00> : vector<8x32xf32>
    %38 = tpu.matmul %36, %37, %cst_16 {dimension_numbers = #tpu.dot_dimension_numbers<[1], [0], [0], [1], [0, 0, 1, 1], [], []>} : vector<8x160xbf16>, vector<160x32xbf16>, vector<8x32xf32> -> vector<8x32xf32>
    %c0_17 = arith.constant 0 : index
    %c0_18 = arith.constant 0 : index
    %39 = vector.load %arg7[%c0_17, %c0_18] : memref<1x32xf32, #tpu.memory_space<vmem>>, vector<1x32xf32>
    %40 = vector.broadcast %39 : vector<1x32xf32> to vector<8x32xf32>
    %41 = arith.addf %38, %40 : vector<8x32xf32>
    %42 = vector.shape_cast %41 : vector<8x32xf32> to vector<1x8x32xf32>
    %43 = vector.shape_cast %42 : vector<1x8x32xf32> to vector<1x4x2x32xf32>
    %cst_19 = arith.constant dense<0xFF800000> : vector<1x4x32xf32>
    %44 = vector.multi_reduction <maximumf>, %43, %cst_19 [2] : vector<1x4x2x32xf32> to vector<1x4x32xf32>
    %cst_20 = arith.constant 0.000000e+00 : f32
    %45 = vector.broadcast %cst_20 : f32 to vector<1x2x32xf32>
    %46 = tpu.concatenate %45, %44, %45 in 1 : vector<1x2x32xf32>, vector<1x4x32xf32>, vector<1x2x32xf32> -> vector<1x8x32xf32>
    %47 = vector.extract_strided_slice %46 {offsets = [0, 0, 0], sizes = [1, 4, 32], strides = [1, 1, 1]} : vector<1x8x32xf32> to vector<1x4x32xf32>
    %48 = vector.extract_strided_slice %46 {offsets = [0, 1, 0], sizes = [1, 4, 32], strides = [1, 1, 1]} : vector<1x8x32xf32> to vector<1x4x32xf32>
    %49 = vector.extract_strided_slice %46 {offsets = [0, 2, 0], sizes = [1, 4, 32], strides = [1, 1, 1]} : vector<1x8x32xf32> to vector<1x4x32xf32>
    %50 = vector.extract_strided_slice %46 {offsets = [0, 3, 0], sizes = [1, 4, 32], strides = [1, 1, 1]} : vector<1x8x32xf32> to vector<1x4x32xf32>
    %51 = vector.extract_strided_slice %46 {offsets = [0, 4, 0], sizes = [1, 4, 32], strides = [1, 1, 1]} : vector<1x8x32xf32> to vector<1x4x32xf32>
    %52 = tpu.concatenate %47, %48, %49, %50, %51 in 2 : vector<1x4x32xf32>, vector<1x4x32xf32>, vector<1x4x32xf32>, vector<1x4x32xf32>, vector<1x4x32xf32> -> vector<1x4x160xf32>
    %53 = vector.shape_cast %52 : vector<1x4x160xf32> to vector<4x160xf32>
    %54 = arith.truncf %53 : vector<4x160xf32> to vector<4x160xbf16>
    %c0_21 = arith.constant 0 : index
    %c0_22 = arith.constant 0 : index
    %55 = vector.load %arg8[%c0_21, %c0_22] : memref<160x32xbf16, #tpu.memory_space<vmem>>, vector<160x32xbf16>
    %cst_23 = arith.constant dense<0.000000e+00> : vector<4x32xf32>
    %56 = tpu.matmul %54, %55, %cst_23 {dimension_numbers = #tpu.dot_dimension_numbers<[1], [0], [0], [1], [0, 0, 1, 1], [], []>} : vector<4x160xbf16>, vector<160x32xbf16>, vector<4x32xf32> -> vector<4x32xf32>
    %c0_24 = arith.constant 0 : index
    %c0_25 = arith.constant 0 : index
    %57 = vector.load %arg9[%c0_24, %c0_25] : memref<1x32xf32, #tpu.memory_space<vmem>>, vector<1x32xf32>
    %58 = vector.broadcast %57 : vector<1x32xf32> to vector<4x32xf32>
    %59 = arith.addf %56, %58 : vector<4x32xf32>
    %60 = vector.shape_cast %59 : vector<4x32xf32> to vector<1x4x32xf32>
    %61 = vector.shape_cast %60 : vector<1x4x32xf32> to vector<1x4x1x32xf32>
    %62 = vector.shape_cast %61 : vector<1x4x1x32xf32> to vector<1x4x1x32xf32>
    %63 = vector.broadcast %62 : vector<1x4x1x32xf32> to vector<1x4x2x32xf32>
    %64 = vector.shape_cast %63 : vector<1x4x2x32xf32> to vector<1x8x32xf32>
    %65 = arith.addf %64, %26 : vector<1x8x32xf32>
    %cst_26 = arith.constant 0.000000e+00 : f32
    %66 = vector.broadcast %cst_26 : f32 to vector<1x2x32xf32>
    %67 = tpu.concatenate %66, %65, %66 in 1 : vector<1x2x32xf32>, vector<1x8x32xf32>, vector<1x2x32xf32> -> vector<1x12x32xf32>
    %68 = vector.extract_strided_slice %67 {offsets = [0, 0, 0], sizes = [1, 8, 32], strides = [1, 1, 1]} : vector<1x12x32xf32> to vector<1x8x32xf32>
    %69 = vector.extract_strided_slice %67 {offsets = [0, 1, 0], sizes = [1, 8, 32], strides = [1, 1, 1]} : vector<1x12x32xf32> to vector<1x8x32xf32>
    %70 = vector.extract_strided_slice %67 {offsets = [0, 2, 0], sizes = [1, 8, 32], strides = [1, 1, 1]} : vector<1x12x32xf32> to vector<1x8x32xf32>
    %71 = vector.extract_strided_slice %67 {offsets = [0, 3, 0], sizes = [1, 8, 32], strides = [1, 1, 1]} : vector<1x12x32xf32> to vector<1x8x32xf32>
    %72 = vector.extract_strided_slice %67 {offsets = [0, 4, 0], sizes = [1, 8, 32], strides = [1, 1, 1]} : vector<1x12x32xf32> to vector<1x8x32xf32>
    %73 = tpu.concatenate %68, %69, %70, %71, %72 in 2 : vector<1x8x32xf32>, vector<1x8x32xf32>, vector<1x8x32xf32>, vector<1x8x32xf32>, vector<1x8x32xf32> -> vector<1x8x160xf32>
    %74 = vector.shape_cast %73 : vector<1x8x160xf32> to vector<8x160xf32>
    %75 = arith.truncf %74 : vector<8x160xf32> to vector<8x160xbf16>
    %c0_27 = arith.constant 0 : index
    %c0_28 = arith.constant 0 : index
    %76 = vector.load %arg10[%c0_27, %c0_28] : memref<160x32xbf16, #tpu.memory_space<vmem>>, vector<160x32xbf16>
    %cst_29 = arith.constant dense<0.000000e+00> : vector<8x32xf32>
    %77 = tpu.matmul %75, %76, %cst_29 {dimension_numbers = #tpu.dot_dimension_numbers<[1], [0], [0], [1], [0, 0, 1, 1], [], []>} : vector<8x160xbf16>, vector<160x32xbf16>, vector<8x32xf32> -> vector<8x32xf32>
    %c0_30 = arith.constant 0 : index
    %c0_31 = arith.constant 0 : index
    %78 = vector.load %arg11[%c0_30, %c0_31] : memref<1x32xf32, #tpu.memory_space<vmem>>, vector<1x32xf32>
    %79 = vector.broadcast %78 : vector<1x32xf32> to vector<8x32xf32>
    %80 = arith.addf %77, %79 : vector<8x32xf32>
    %81 = vector.shape_cast %80 : vector<8x32xf32> to vector<1x8x32xf32>
    %82 = vector.shape_cast %81 : vector<1x8x32xf32> to vector<1x8x1x32xf32>
    %83 = vector.shape_cast %82 : vector<1x8x1x32xf32> to vector<1x8x1x32xf32>
    %84 = vector.broadcast %83 : vector<1x8x1x32xf32> to vector<1x8x2x32xf32>
    %85 = vector.shape_cast %84 : vector<1x8x2x32xf32> to vector<1x16x32xf32>
    %86 = arith.addf %85, %8 : vector<1x16x32xf32>
    %cst_32 = arith.constant 0.000000e+00 : f32
    %87 = vector.broadcast %cst_32 : f32 to vector<1x2x32xf32>
    %88 = tpu.concatenate %87, %86, %87 in 1 : vector<1x2x32xf32>, vector<1x16x32xf32>, vector<1x2x32xf32> -> vector<1x20x32xf32>
    %89 = vector.extract_strided_slice %88 {offsets = [0, 0, 0], sizes = [1, 16, 32], strides = [1, 1, 1]} : vector<1x20x32xf32> to vector<1x16x32xf32>
    %90 = vector.extract_strided_slice %88 {offsets = [0, 1, 0], sizes = [1, 16, 32], strides = [1, 1, 1]} : vector<1x20x32xf32> to vector<1x16x32xf32>
    %91 = vector.extract_strided_slice %88 {offsets = [0, 2, 0], sizes = [1, 16, 32], strides = [1, 1, 1]} : vector<1x20x32xf32> to vector<1x16x32xf32>
    %92 = vector.extract_strided_slice %88 {offsets = [0, 3, 0], sizes = [1, 16, 32], strides = [1, 1, 1]} : vector<1x20x32xf32> to vector<1x16x32xf32>
    %93 = vector.extract_strided_slice %88 {offsets = [0, 4, 0], sizes = [1, 16, 32], strides = [1, 1, 1]} : vector<1x20x32xf32> to vector<1x16x32xf32>
    %94 = tpu.concatenate %89, %90, %91, %92, %93 in 2 : vector<1x16x32xf32>, vector<1x16x32xf32>, vector<1x16x32xf32>, vector<1x16x32xf32>, vector<1x16x32xf32> -> vector<1x16x160xf32>
    %95 = vector.shape_cast %94 : vector<1x16x160xf32> to vector<16x160xf32>
    %96 = arith.truncf %95 : vector<16x160xf32> to vector<16x160xbf16>
    %c0_33 = arith.constant 0 : index
    %c0_34 = arith.constant 0 : index
    %97 = vector.load %arg12[%c0_33, %c0_34] : memref<160x4xbf16, #tpu.memory_space<vmem>>, vector<160x4xbf16>
    %cst_35 = arith.constant dense<0.000000e+00> : vector<16x4xf32>
    %98 = tpu.matmul %96, %97, %cst_35 {dimension_numbers = #tpu.dot_dimension_numbers<[1], [0], [0], [1], [0, 0, 1, 1], [], []>} : vector<16x160xbf16>, vector<160x4xbf16>, vector<16x4xf32> -> vector<16x4xf32>
    %c0_36 = arith.constant 0 : index
    %c0_37 = arith.constant 0 : index
    %99 = vector.load %arg13[%c0_36, %c0_37] : memref<1x4xf32, #tpu.memory_space<vmem>>, vector<1x4xf32>
    %100 = vector.broadcast %99 : vector<1x4xf32> to vector<16x4xf32>
    %101 = arith.addf %98, %100 : vector<16x4xf32>
    %102 = vector.shape_cast %101 : vector<16x4xf32> to vector<1x16x4xf32>
    %103 = arith.negf %102 : vector<1x16x4xf32>
    %104 = math.exp %103 : vector<1x16x4xf32>
    %cst_38 = arith.constant 1.000000e+00 : f32
    %105 = vector.broadcast %cst_38 : f32 to vector<1x16x4xf32>
    %106 = arith.addf %105, %104 : vector<1x16x4xf32>
    %107 = arith.divf %105, %106 : vector<1x16x4xf32>
    %c0_39 = arith.constant 0 : index
    %c0_40 = arith.constant 0 : index
    %c0_41 = arith.constant 0 : index
    %108 = vector.load %arg14[%c0_39, %c0_40, %c0_41] : memref<1x16x4xf32, #tpu.memory_space<vmem>>, vector<1x16x4xf32>
    tpu.vector_store %arg14[%c0_39, %c0_40, %c0_41], %107 {strides = array<i32>} : memref<1x16x4xf32, #tpu.memory_space<vmem>>, vector<1x16x4xf32>,
    return
  }
  func.func @transform_0(%arg0: i32) -> (i32, i32, i32) {
    %c0_i32 = arith.constant 0 : i32
    %c0_i32_0 = arith.constant 0 : i32
    %c0_i32_1 = arith.constant 0 : i32
    return %arg0, %c0_i32, %c0_i32_0 : i32, i32, i32
  }
  func.func @transform_1(%arg0: i32) -> (i32, i32) {
    %c0_i32 = arith.constant 0 : i32
    %c0_i32_0 = arith.constant 0 : i32
    %c0_i32_1 = arith.constant 0 : i32
    return %c0_i32, %c0_i32_0 : i32, i32
  }
  func.func @transform_2(%arg0: i32) -> (i32, i32) {
    %c0_i32 = arith.constant 0 : i32
    %c0_i32_0 = arith.constant 0 : i32
    %c0_i32_1 = arith.constant 0 : i32
    return %c0_i32, %c0_i32_0 : i32, i32
  }
  func.func @transform_3(%arg0: i32) -> (i32, i32) {
    %c0_i32 = arith.constant 0 : i32
    %c0_i32_0 = arith.constant 0 : i32
    %c0_i32_1 = arith.constant 0 : i32
    return %c0_i32, %c0_i32_0 : i32, i32
  }
  func.func @transform_4(%arg0: i32) -> (i32, i32) {
    %c0_i32 = arith.constant 0 : i32
    %c0_i32_0 = arith.constant 0 : i32
    %c0_i32_1 = arith.constant 0 : i32
    return %c0_i32, %c0_i32_0 : i32, i32
  }
  func.func @transform_5(%arg0: i32) -> (i32, i32) {
    %c0_i32 = arith.constant 0 : i32
    %c0_i32_0 = arith.constant 0 : i32
    %c0_i32_1 = arith.constant 0 : i32
    return %c0_i32, %c0_i32_0 : i32, i32
  }
  func.func @transform_6(%arg0: i32) -> (i32, i32) {
    %c0_i32 = arith.constant 0 : i32
    %c0_i32_0 = arith.constant 0 : i32
    %c0_i32_1 = arith.constant 0 : i32
    return %c0_i32, %c0_i32_0 : i32, i32
  }
  func.func @transform_7(%arg0: i32) -> (i32, i32) {
    %c0_i32 = arith.constant 0 : i32
    %c0_i32_0 = arith.constant 0 : i32
    %c0_i32_1 = arith.constant 0 : i32
    return %c0_i32, %c0_i32_0 : i32, i32
  }
  func.func @transform_8(%arg0: i32) -> (i32, i32) {
    %c0_i32 = arith.constant 0 : i32
    %c0_i32_0 = arith.constant 0 : i32
    %c0_i32_1 = arith.constant 0 : i32
    return %c0_i32, %c0_i32_0 : i32, i32
  }
  func.func @transform_9(%arg0: i32) -> (i32, i32) {
    %c0_i32 = arith.constant 0 : i32
    %c0_i32_0 = arith.constant 0 : i32
    %c0_i32_1 = arith.constant 0 : i32
    return %c0_i32, %c0_i32_0 : i32, i32
  }
  func.func @transform_10(%arg0: i32) -> (i32, i32) {
    %c0_i32 = arith.constant 0 : i32
    %c0_i32_0 = arith.constant 0 : i32
    %c0_i32_1 = arith.constant 0 : i32
    return %c0_i32, %c0_i32_0 : i32, i32
  }
  func.func @transform_11(%arg0: i32) -> (i32, i32) {
    %c0_i32 = arith.constant 0 : i32
    %c0_i32_0 = arith.constant 0 : i32
    %c0_i32_1 = arith.constant 0 : i32
    return %c0_i32, %c0_i32_0 : i32, i32
  }
  func.func @transform_12(%arg0: i32) -> (i32, i32) {
    %c0_i32 = arith.constant 0 : i32
    %c0_i32_0 = arith.constant 0 : i32
    %c0_i32_1 = arith.constant 0 : i32
    return %c0_i32, %c0_i32_0 : i32, i32
  }
  func.func @transform_13(%arg0: i32) -> (i32, i32, i32) {
    %c0_i32 = arith.constant 0 : i32
    %c0_i32_0 = arith.constant 0 : i32
    %c0_i32_1 = arith.constant 0 : i32
    return %arg0, %c0_i32, %c0_i32_0 : i32, i32, i32
  }
}

</mosaic_0001>

<llo_original>
// kernel: tpu_custom_call.1
$region0: #{tpu_custom_call.1}
  #allocation0 [shape = 'u32[]', space=smem, size = 0x4, offset = 0x4, fixed_abs, tag = 'smem constant byte address 0x4 - core index']
  #allocation1 [shape = 'u32[144,128]{1,0:T(1,128)}', space=vmem, size = 0x12000, scoped, tag = 'internal scratch']
  %s0 = inlined_call_operand.vmem [shape: f32[2,16,4], index: 0, kind: input, shape index: {}]
  %s1 = inlined_call_operand.vmem [shape: bf16[4,32], index: 1, kind: input, shape index: {}]
  %s2 = inlined_call_operand.vmem [shape: f32[1,32], index: 2, kind: input, shape index: {}]
  %s3 = inlined_call_operand.vmem [shape: bf16[160,32], index: 3, kind: input, shape index: {}]
  %s4 = inlined_call_operand.vmem [shape: f32[1,32], index: 4, kind: input, shape index: {}]
  %s5 = inlined_call_operand.vmem [shape: bf16[160,32], index: 5, kind: input, shape index: {}]
  %s6 = inlined_call_operand.vmem [shape: f32[1,32], index: 6, kind: input, shape index: {}]
  %s7 = inlined_call_operand.vmem [shape: bf16[160,32], index: 7, kind: input, shape index: {}]
  %s8 = inlined_call_operand.vmem [shape: f32[1,32], index: 8, kind: input, shape index: {}]
  %s9 = inlined_call_operand.vmem [shape: bf16[160,32], index: 9, kind: input, shape index: {}]
  %s10 = inlined_call_operand.vmem [shape: f32[1,32], index: 10, kind: input, shape index: {}]
  %s11 = inlined_call_operand.vmem [shape: bf16[160,4], index: 11, kind: input, shape index: {}]
  %s12 = inlined_call_operand.vmem [shape: f32[1,4], index: 12, kind: input, shape index: {}]
  %s13 = inlined_call_operand.vmem [shape: f32[2,16,4], index: 13, kind: output, shape index: {}]
  %s14 = sld [smem:[#allocation0]]
  $region85: #{tpu_custom_call.1} parent=0
    _
  %s16 = ssub.s32 1, %s14
  %s17 = scalar_select 0, %s16, %s14
  loop: start=0, step=1, limit=4
  $region2: #{tpu_custom_call.1} parent=0 // loop_pre_header
    _
  $region3: #{tpu_custom_call.1} parent=0 // loop_header
    %s19 = sphi 0, %s23
    %p20 = scmp.ge.s32.totalorder %s19, 4
    %s29 = sphi 0, %s31
    %s32 = sphi 0, %s29
    %s33 = sphi 0, %s32
    %s49 = sphi 0, %s33
    %s53 = sphi 0, %s53
    %s55 = sphi 0, %s53
    %s56 = sphi 0, %s55
    %s70 = sphi 0, %s56
    %s74 = sphi 0, %s74
    %s76 = sphi 0, %s74
    %s77 = sphi 0, %s76
    %s91 = sphi 0, %s77
    %s95 = sphi 0, %s95
    %s97 = sphi 0, %s95
    %s98 = sphi 0, %s97
    %s112 = sphi 0, %s98
    %s116 = sphi 0, %s116
    %s118 = sphi 0, %s116
    %s119 = sphi 0, %s118
    %s133 = sphi 0, %s119
    %s137 = sphi 0, %s137
    %s139 = sphi 0, %s137
    %s140 = sphi 0, %s139
    %s154 = sphi 0, %s140
    %s158 = sphi 0, %s158
    %s160 = sphi 0, %s158
    %s161 = sphi 0, %s160
    %s175 = sphi 0, %s161
    %s179 = sphi 0, %s179
    %s181 = sphi 0, %s179
    %s182 = sphi 0, %s181
    %s196 = sphi 0, %s182
    %s200 = sphi 0, %s200
    %s202 = sphi 0, %s200
    %s203 = sphi 0, %s202
    %s217 = sphi 0, %s203
    %s221 = sphi 0, %s221
    %s223 = sphi 0, %s221
    %s224 = sphi 0, %s223
    %s238 = sphi 0, %s224
    %s242 = sphi 0, %s242
    %s244 = sphi 0, %s242
    %s245 = sphi 0, %s244
    %s259 = sphi 0, %s245
    %s263 = sphi 0, %s263
    %s265 = sphi 0, %s263
    %s266 = sphi 0, %s265
    %s280 = sphi 0, %s266
    %s284 = sphi 0, %s284
    %s286 = sphi 0, %s284
    %s287 = sphi 0, %s286
    %s301 = sphi 0, %s287
    %s307 = sphi 0, %s309
    %s310 = sphi 0, %s307
    %s311 = sphi 0, %s310
    %s327 = sphi 0, %s311
  $region4: #{tpu_custom_call.1} parent=0 // loop_header_branch
    %22 = sbr.rel (%p20) target = $region8
  $region5: #{tpu_custom_call.1} parent=0 // loop_body
    %s24 = ssub.s32 %s19, 1
    %s25 = ssub.s32 %s19, 2
    %s26 = sadd.s32 %s19, 1
    %s27 = ssub.s32 %s19, %s26
    %p28 = scmp.eq.s32.totalorder %s27, 0
    %s30 = sadd.s32 %s29, 1
    %s31 = scalar_select %p28, %s29, %s30
    %p34 = pneg %p28
    %p35 = scmp.eq.s32.totalorder %s19, 1
    %p36 = por %p34, %p35
    %p37 = scmp.ne.s32.totalorder %s29, %s32
    %p38 = scmp.eq.s32.totalorder %s19, 0
    %p39 = por %p37, %p38
    %p40 = scmp.ne.s32.totalorder %s29, %s32
    %p41 = scmp.eq.s32.totalorder %s24, 1
    %p42 = por %p40, %p41
    %p43 = scmp.ne.s32.totalorder %s32, %s33
    %p44 = scmp.eq.s32.totalorder %s24, 0
    %p45 = por %p43, %p44
    %p46 = scmp.ne.s32.totalorder %s32, %s33
    %p47 = scmp.eq.s32.totalorder %s25, 1
    %p48 = por %p46, %p47
    %p50 = scmp.ne.s32.totalorder %s33, %s49
    %p51 = scmp.eq.s32.totalorder %s25, 0
    %p52 = por %p50, %p51
    %s54 = sadd.s32 %s53, 1
    %p57 = scmp.eq.s32.totalorder %s19, 1
    %p58 = scmp.ne.s32.totalorder %s53, %s55
    %p59 = scmp.eq.s32.totalorder %s19, 0
    %p60 = por %p58, %p59
    %p61 = scmp.ne.s32.totalorder %s53, %s55
    %p62 = scmp.eq.s32.totalorder %s24, 1
    %p63 = por %p61, %p62
    %p64 = scmp.ne.s32.totalorder %s55, %s56
    %p65 = scmp.eq.s32.totalorder %s24, 0
    %p66 = por %p64, %p65
    %p67 = scmp.ne.s32.totalorder %s55, %s56
    %p68 = scmp.eq.s32.totalorder %s25, 1
    %p69 = por %p67, %p68
    %p71 = scmp.ne.s32.totalorder %s56, %s70
    %p72 = scmp.eq.s32.totalorder %s25, 0
    %p73 = por %p71, %p72
    %s75 = sadd.s32 %s74, 1
    %p78 = scmp.eq.s32.totalorder %s19, 1
    %p79 = scmp.ne.s32.totalorder %s74, %s76
    %p80 = scmp.eq.s32.totalorder %s19, 0
    %p81 = por %p79, %p80
    %p82 = scmp.ne.s32.totalorder %s74, %s76
    %p83 = scmp.eq.s32.totalorder %s24, 1
    %p84 = por %p82, %p83
    %p85 = scmp.ne.s32.totalorder %s76, %s77
    %p86 = scmp.eq.s32.totalorder %s24, 0
    %p87 = por %p85, %p86
    %p88 = scmp.ne.s32.totalorder %s76, %s77
    %p89 = scmp.eq.s32.totalorder %s25, 1
    %p90 = por %p88, %p89
    %p92 = scmp.ne.s32.totalorder %s77, %s91
    %p93 = scmp.eq.s32.totalorder %s25, 0
    %p94 = por %p92, %p93
    %s96 = sadd.s32 %s95, 1
    %p99 = scmp.eq.s32.totalorder %s19, 1
    %p100 = scmp.ne.s32.totalorder %s95, %s97
    %p101 = scmp.eq.s32.totalorder %s19, 0
    %p102 = por %p100, %p101
    %p103 = scmp.ne.s32.totalorder %s95, %s97
    %p104 = scmp.eq.s32.totalorder %s24, 1
    %p105 = por %p103, %p104
    %p106 = scmp.ne.s32.totalorder %s97, %s98
    %p107 = scmp.eq.s32.totalorder %s24, 0
    %p108 = por %p106, %p107
    %p109 = scmp.ne.s32.totalorder %s97, %s98
    %p110 = scmp.eq.s32.totalorder %s25, 1
    %p111 = por %p109, %p110
    %p113 = scmp.ne.s32.totalorder %s98, %s112
    %p114 = scmp.eq.s32.totalorder %s25, 0
    %p115 = por %p113, %p114
    %s117 = sadd.s32 %s116, 1
    %p120 = scmp.eq.s32.totalorder %s19, 1
    %p121 = scmp.ne.s32.totalorder %s116, %s118
    %p122 = scmp.eq.s32.totalorder %s19, 0
    %p123 = por %p121, %p122
    %p124 = scmp.ne.s32.totalorder %s116, %s118
    %p125 = scmp.eq.s32.totalorder %s24, 1
    %p126 = por %p124, %p125
    %p127 = scmp.ne.s32.totalorder %s118, %s119
    %p128 = scmp.eq.s32.totalorder %s24, 0
    %p129 = por %p127, %p128
    %p130 = scmp.ne.s32.totalorder %s118, %s119
    %p131 = scmp.eq.s32.totalorder %s25, 1
    %p132 = por %p130, %p131
    %p134 = scmp.ne.s32.totalorder %s119, %s133
    %p135 = scmp.eq.s32.totalorder %s25, 0
    %p136 = por %p134, %p135
    %s138 = sadd.s32 %s137, 1
    %p141 = scmp.eq.s32.totalorder %s19, 1
    %p142 = scmp.ne.s32.totalorder %s137, %s139
    %p143 = scmp.eq.s32.totalorder %s19, 0
    %p144 = por %p142, %p143
    %p145 = scmp.ne.s32.totalorder %s137, %s139
    %p146 = scmp.eq.s32.totalorder %s24, 1
    %p147 = por %p145, %p146
    %p148 = scmp.ne.s32.totalorder %s139, %s140
    %p149 = scmp.eq.s32.totalorder %s24, 0
    %p150 = por %p148, %p149
    %p151 = scmp.ne.s32.totalorder %s139, %s140
    %p152 = scmp.eq.s32.totalorder %s25, 1
    %p153 = por %p151, %p152
    %p155 = scmp.ne.s32.totalorder %s140, %s154
    %p156 = scmp.eq.s32.totalorder %s25, 0
    %p157 = por %p155, %p156
    %s159 = sadd.s32 %s158, 1
    %p162 = scmp.eq.s32.totalorder %s19, 1
    %p163 = scmp.ne.s32.totalorder %s158, %s160
    %p164 = scmp.eq.s32.totalorder %s19, 0
    %p165 = por %p163, %p164
    %p166 = scmp.ne.s32.totalorder %s158, %s160
    %p167 = scmp.eq.s32.totalorder %s24, 1
    %p168 = por %p166, %p167
    %p169 = scmp.ne.s32.totalorder %s160, %s161
    %p170 = scmp.eq.s32.totalorder %s24, 0
    %p171 = por %p169, %p170
    %p172 = scmp.ne.s32.totalorder %s160, %s161
    %p173 = scmp.eq.s32.totalorder %s25, 1
    %p174 = por %p172, %p173
    %p176 = scmp.ne.s32.totalorder %s161, %s175
    %p177 = scmp.eq.s32.totalorder %s25, 0
    %p178 = por %p176, %p177
    %s180 = sadd.s32 %s179, 1
    %p183 = scmp.eq.s32.totalorder %s19, 1
    %p184 = scmp.ne.s32.totalorder %s179, %s181
    %p185 = scmp.eq.s32.totalorder %s19, 0
    %p186 = por %p184, %p185
    %p187 = scmp.ne.s32.totalorder %s179, %s181
    %p188 = scmp.eq.s32.totalorder %s24, 1
    %p189 = por %p187, %p188
    %p190 = scmp.ne.s32.totalorder %s181, %s182
    %p191 = scmp.eq.s32.totalorder %s24, 0
    %p192 = por %p190, %p191
    %p193 = scmp.ne.s32.totalorder %s181, %s182
    %p194 = scmp.eq.s32.totalorder %s25, 1
    %p195 = por %p193, %p194
    %p197 = scmp.ne.s32.totalorder %s182, %s196
    %p198 = scmp.eq.s32.totalorder %s25, 0
    %p199 = por %p197, %p198
    %s201 = sadd.s32 %s200, 1
    %p204 = scmp.eq.s32.totalorder %s19, 1
    %p205 = scmp.ne.s32.totalorder %s200, %s202
    %p206 = scmp.eq.s32.totalorder %s19, 0
    %p207 = por %p205, %p206
    %p208 = scmp.ne.s32.totalorder %s200, %s202
    %p209 = scmp.eq.s32.totalorder %s24, 1
    %p210 = por %p208, %p209
    %p211 = scmp.ne.s32.totalorder %s202, %s203
    %p212 = scmp.eq.s32.totalorder %s24, 0
    %p213 = por %p211, %p212
    %p214 = scmp.ne.s32.totalorder %s202, %s203
    %p215 = scmp.eq.s32.totalorder %s25, 1
    %p216 = por %p214, %p215
    %p218 = scmp.ne.s32.totalorder %s203, %s217
    %p219 = scmp.eq.s32.totalorder %s25, 0
    %p220 = por %p218, %p219
    %s222 = sadd.s32 %s221, 1
    %p225 = scmp.eq.s32.totalorder %s19, 1
    %p226 = scmp.ne.s32.totalorder %s221, %s223
    %p227 = scmp.eq.s32.totalorder %s19, 0
    %p228 = por %p226, %p227
    %p229 = scmp.ne.s32.totalorder %s221, %s223
    %p230 = scmp.eq.s32.totalorder %s24, 1
    %p231 = por %p229, %p230
    %p232 = scmp.ne.s32.totalorder %s223, %s224
    %p233 = scmp.eq.s32.totalorder %s24, 0
    %p234 = por %p232, %p233
    %p235 = scmp.ne.s32.totalorder %s223, %s224
    %p236 = scmp.eq.s32.totalorder %s25, 1
    %p237 = por %p235, %p236
    %p239 = scmp.ne.s32.totalorder %s224, %s238
    %p240 = scmp.eq.s32.totalorder %s25, 0
    %p241 = por %p239, %p240
    %s243 = sadd.s32 %s242, 1
    %p246 = scmp.eq.s32.totalorder %s19, 1
    %p247 = scmp.ne.s32.totalorder %s242, %s244
    %p248 = scmp.eq.s32.totalorder %s19, 0
    %p249 = por %p247, %p248
    %p250 = scmp.ne.s32.totalorder %s242, %s244
    %p251 = scmp.eq.s32.totalorder %s24, 1
    %p252 = por %p250, %p251
    %p253 = scmp.ne.s32.totalorder %s244, %s245
    %p254 = scmp.eq.s32.totalorder %s24, 0
    %p255 = por %p253, %p254
    %p256 = scmp.ne.s32.totalorder %s244, %s245
    %p257 = scmp.eq.s32.totalorder %s25, 1
    %p258 = por %p256, %p257
    %p260 = scmp.ne.s32.totalorder %s245, %s259
    %p261 = scmp.eq.s32.totalorder %s25, 0
    %p262 = por %p260, %p261
    %s264 = sadd.s32 %s263, 1
    %p267 = scmp.eq.s32.totalorder %s19, 1
    %p268 = scmp.ne.s32.totalorder %s263, %s265
    %p269 = scmp.eq.s32.totalorder %s19, 0
    %p270 = por %p268, %p269
    %p271 = scmp.ne.s32.totalorder %s263, %s265
    %p272 = scmp.eq.s32.totalorder %s24, 1
    %p273 = por %p271, %p272
    %p274 = scmp.ne.s32.totalorder %s265, %s266
    %p275 = scmp.eq.s32.totalorder %s24, 0
    %p276 = por %p274, %p275
    %p277 = scmp.ne.s32.totalorder %s265, %s266
    %p278 = scmp.eq.s32.totalorder %s25, 1
    %p279 = por %p277, %p278
    %p281 = scmp.ne.s32.totalorder %s266, %s280
    %p282 = scmp.eq.s32.totalorder %s25, 0
    %p283 = por %p281, %p282
    %s285 = sadd.s32 %s284, 1
    %p288 = scmp.eq.s32.totalorder %s19, 1
    %p289 = scmp.ne.s32.totalorder %s284, %s286
    %p290 = scmp.eq.s32.totalorder %s19, 0
    %p291 = por %p289, %p290
    %p292 = scmp.ne.s32.totalorder %s284, %s286
    %p293 = scmp.eq.s32.totalorder %s24, 1
    %p294 = por %p292, %p293
    %p295 = scmp.ne.s32.totalorder %s286, %s287
    %p296 = scmp.eq.s32.totalorder %s24, 0
    %p297 = por %p295, %p296
    %p298 = scmp.ne.s32.totalorder %s286, %s287
    %p299 = scmp.eq.s32.totalorder %s25, 1
    %p300 = por %p298, %p299
    %p302 = scmp.ne.s32.totalorder %s287, %s301
    %p303 = scmp.eq.s32.totalorder %s25, 0
    %p304 = por %p302, %p303
    %s305 = ssub.s32 %s19, %s26
    %p306 = scmp.eq.s32.totalorder %s305, 0
    %s308 = sadd.s32 %s307, 1
    %s309 = scalar_select %p306, %s307, %s308
    %p312 = pneg %p306
    %p313 = scmp.eq.s32.totalorder %s19, 1
    %p314 = por %p312, %p313
    %p315 = scmp.ne.s32.totalorder %s307, %s310
    %p316 = scmp.eq.s32.totalorder %s19, 0
    %p317 = por %p315, %p316
    %p318 = scmp.ne.s32.totalorder %s307, %s310
    %p319 = scmp.eq.s32.totalorder %s24, 1
    %p320 = por %p318, %p319
    %p321 = scmp.ne.s32.totalorder %s310, %s311
    %p322 = scmp.eq.s32.totalorder %s24, 0
    %p323 = por %p321, %p322
    %p324 = scmp.ne.s32.totalorder %s310, %s311
    %p325 = scmp.eq.s32.totalorder %s25, 1
    %p326 = por %p324, %p325
    %p328 = scmp.ne.s32.totalorder %s311, %s327
    %p329 = scmp.eq.s32.totalorder %s25, 0
    %p330 = por %p328, %p329
    %p331 = scmp.le.s32.totalorder 1, %s19
    %p332 = scmp.lt.s32.totalorder %s19, 3
    %p333 = pnand %p331, %p332
    %p334 = pneg %p333
    // Predicated region
    $region9: #{tpu_custom_call.1} parent=5 // pred_check
      _
    $region10: #{tpu_custom_call.1} parent=5 // pred_check_branch
      %336 = sbr.rel (%p333) target = $region12
    $region11: #{tpu_custom_call.1} parent=5 // pred_region
      %s337 = ssub.s32 %s19, 1
      // Predicated region
      $region13: #{tpu_custom_call.1} parent=11 // pred_check
        %p338 = pneg %p66
      $region14: #{tpu_custom_call.1} parent=11 // pred_check_branch
        %340 = sbr.rel (%p338) target = $region16
      $region15: #{tpu_custom_call.1} parent=11 // pred_region
        _
      $region16: #{tpu_custom_call.1} parent=11 // pred_fallthru
        _
      // Predicated region
      $region17: #{tpu_custom_call.1} parent=11 // pred_check
        %p341 = pneg %p87
      $region18: #{tpu_custom_call.1} parent=11 // pred_check_branch
        %343 = sbr.rel (%p341) target = $region20
      $region19: #{tpu_custom_call.1} parent=11 // pred_region
        _
      $region20: #{tpu_custom_call.1} parent=11 // pred_fallthru
        _
      // Predicated region
      $region21: #{tpu_custom_call.1} parent=11 // pred_check
        %p344 = pneg %p108
      $region22: #{tpu_custom_call.1} parent=11 // pred_check_branch
        %346 = sbr.rel (%p344) target = $region24
      $region23: #{tpu_custom_call.1} parent=11 // pred_region
        _
      $region24: #{tpu_custom_call.1} parent=11 // pred_fallthru
        _
      // Predicated region
      $region25: #{tpu_custom_call.1} parent=11 // pred_check
        %p347 = pneg %p129
      $region26: #{tpu_custom_call.1} parent=11 // pred_check_branch
        %349 = sbr.rel (%p347) target = $region28
      $region27: #{tpu_custom_call.1} parent=11 // pred_region
        _
      $region28: #{tpu_custom_call.1} parent=11 // pred_fallthru
        _
      // Predicated region
      $region29: #{tpu_custom_call.1} parent=11 // pred_check
        %p350 = pneg %p150
      $region30: #{tpu_custom_call.1} parent=11 // pred_check_branch
        %352 = sbr.rel (%p350) target = $region32
      $region31: #{tpu_custom_call.1} parent=11 // pred_region
        _
      $region32: #{tpu_custom_call.1} parent=11 // pred_fallthru
        _
      // Predicated region
      $region33: #{tpu_custom_call.1} parent=11 // pred_check
        %p353 = pneg %p171
      $region34: #{tpu_custom_call.1} parent=11 // pred_check_branch
        %355 = sbr.rel (%p353) target = $region36
      $region35: #{tpu_custom_call.1} parent=11 // pred_region
        _
      $region36: #{tpu_custom_call.1} parent=11 // pred_fallthru
        _
      // Predicated region
      $region37: #{tpu_custom_call.1} parent=11 // pred_check
        %p356 = pneg %p192
      $region38: #{tpu_custom_call.1} parent=11 // pred_check_branch
        %358 = sbr.rel (%p356) target = $region40
      $region39: #{tpu_custom_call.1} parent=11 // pred_region
        _
      $region40: #{tpu_custom_call.1} parent=11 // pred_fallthru
        _
      // Predicated region
      $region41: #{tpu_custom_call.1} parent=11 // pred_check
        %p359 = pneg %p213
      $region42: #{tpu_custom_call.1} parent=11 // pred_check_branch
        %361 = sbr.rel (%p359) target = $region44
      $region43: #{tpu_custom_call.1} parent=11 // pred_region
        _
      $region44: #{tpu_custom_call.1} parent=11 // pred_fallthru
        _
      // Predicated region
      $region45: #{tpu_custom_call.1} parent=11 // pred_check
        %p362 = pneg %p234
      $region46: #{tpu_custom_call.1} parent=11 // pred_check_branch
        %364 = sbr.rel (%p362) target = $region48
      $region47: #{tpu_custom_call.1} parent=11 // pred_region
        _
      $region48: #{tpu_custom_call.1} parent=11 // pred_fallthru
        _
      // Predicated region
      $region49: #{tpu_custom_call.1} parent=11 // pred_check
        %p365 = pneg %p255
      $region50: #{tpu_custom_call.1} parent=11 // pred_check_branch
        %367 = sbr.rel (%p365) target = $region52
      $region51: #{tpu_custom_call.1} parent=11 // pred_region
        _
      $region52: #{tpu_custom_call.1} parent=11 // pred_fallthru
        _
      // Predicated region
      $region53: #{tpu_custom_call.1} parent=11 // pred_check
        %p368 = pneg %p276
      $region54: #{tpu_custom_call.1} parent=11 // pred_check_branch
        %370 = sbr.rel (%p368) target = $region56
      $region55: #{tpu_custom_call.1} parent=11 // pred_region
        _
      $region56: #{tpu_custom_call.1} parent=11 // pred_fallthru
        _
      // Predicated region
      $region57: #{tpu_custom_call.1} parent=11 // pred_check
        %p371 = pneg %p297
      $region58: #{tpu_custom_call.1} parent=11 // pred_check_branch
        %373 = sbr.rel (%p371) target = $region60
      $region59: #{tpu_custom_call.1} parent=11 // pred_region
        _
      $region60: #{tpu_custom_call.1} parent=11 // pred_fallthru
        _
    $region12: #{tpu_custom_call.1} parent=5 // pred_fallthru
      _
    %p374 = scmp.lt.s32.totalorder %s19, 2
    // Predicated region
    $region61: #{tpu_custom_call.1} parent=5 // pred_check
      %p375 = pneg %p374
    $region62: #{tpu_custom_call.1} parent=5 // pred_check_branch
      %377 = sbr.rel (%p375) target = $region64
    $region63: #{tpu_custom_call.1} parent=5 // pred_region
      // Predicated region
      $region65: #{tpu_custom_call.1} parent=63 // pred_check
        %p378 = pneg %p39
      $region66: #{tpu_custom_call.1} parent=63 // pred_check_branch
        %380 = sbr.rel (%p378) target = $region68
      $region67: #{tpu_custom_call.1} parent=63 // pred_region
        %p381 = scmp.lt.s32.totalorder %s19, 1
        %s382 = scalar_select %p381, %s19, 1
        %s383 = smul.addr %s382, 2
        %s384 = smul.addr %s383, 8
        %s385 = scalar_lea.vmem %s0, %s384
      $region68: #{tpu_custom_call.1} parent=63 // pred_fallthru
        _
    $region64: #{tpu_custom_call.1} parent=5 // pred_fallthru
      _
    %p386 = scmp.le.s32.totalorder 1, %s19
    %p387 = scmp.lt.s32.totalorder %s19, 3
    %p388 = pnand %p386, %p387
    %p389 = pneg %p388
    // Predicated region
    $region69: #{tpu_custom_call.1} parent=5 // pred_check
      _
    $region70: #{tpu_custom_call.1} parent=5 // pred_check_branch
      %391 = sbr.rel (%p388) target = $region72
    $region71: #{tpu_custom_call.1} parent=5 // pred_region
      %s392 = ssub.s32 %s19, 1
      %p393 = scmp.lt.s32.totalorder %s24, 1
      %s394 = scalar_select %p393, %s24, 1
      %s395 = smul.addr %s394, 2
      %s396 = smul.addr %s395, 8
      %s397 = scalar_lea.vmem %s0, %s396
      %p398 = pneg %p45
      %p399 = pneg %p42
      %p400 = pneg %p66
      %p401 = pneg %p63
      %p402 = pneg %p87
      %p403 = pneg %p84
      %p404 = pneg %p108
      %p405 = pneg %p105
      %p406 = pneg %p129
      %p407 = pneg %p126
      %p408 = pneg %p150
      %p409 = pneg %p147
      %p410 = pneg %p171
      %p411 = pneg %p168
      %p412 = pneg %p192
      %p413 = pneg %p189
      %p414 = pneg %p213
      %p415 = pneg %p210
      %p416 = pneg %p234
      %p417 = pneg %p231
      %p418 = pneg %p255
      %p419 = pneg %p252
      %p420 = pneg %p276
      %p421 = pneg %p273
      %p422 = pneg %p297
      %p423 = pneg %p294
      %p424 = pneg %p323
      %p425 = pneg %p320
      %p426 = scmp.lt.s32.totalorder %s24, 1
      %s427 = scalar_select %p426, %s24, 1
      %s428 = smul.addr %s427, 2
      %s429 = smul.addr %s428, 8
      %s430 = scalar_lea.vmem %s13, %s429
      %p431 = scmp.lt.s32.totalorder %s24, 1
      %s432 = scalar_select %p431, %s24, 1
      %s433 = smul.addr %s432, 2
      %s434 = smul.addr %s433, 8
      %s435 = scalar_lea.vmem %s0, %s434
      %p436 = scmp.lt.s32.totalorder %s24, 1
      %s437 = scalar_select %p436, %s24, 1
      %s438 = smul.addr %s437, 2
      %s439 = smul.addr %s438, 8
      %s440 = scalar_lea.vmem %s13, %s439
      %v442 = vld [vmem:[%s435] sm:$0xff]
      %v443 = vld [vmem:[%s435 + $0x8] sm:$0xff]
      %v444 = vpack.c.bf16 %v443, %v442
      %v445 = vld [vmem:[%s1] sm:$0x3]
      %v446 = vld [vmem:[%s2] sm:$0x1]
      %v448 = vlaneseq
      %v449 = vshrl.u32 %v448, 7
      %v450 = vsub.s32 0, %v449
      %v451 = vrot.slane %v446, %v450
      %vm453 = vcmask 31744
      %v455 = vsel %vm453, %v444, 0
      %vm457 = vcmask 1041408
      %v459 = vsel %vm457, %v445, 0
      %461 = vmatprep.subr.bf16.mxu0 0
      %462 = vmatpush1.bf16.msra.mxu0 %v459
      %463 = vmatprep.subr.bf16.mxu0 0
      %464 = vmatpush1.bf16.msra.mxu0 0
      %465 = vmatprep.subr.bf16.mxu0 0
      %466 = vmatpush1.bf16.msra.mxu0 0
      %467 = vmatprep.subr.bf16.mxu0 0
      %468 = vmatpush1.bf16.msra.mxu0 0
      %469 = vmatprep.subr.bf16.mxu0 0
      %470 = vmatpush1.bf16.msra.mxu0 0
      %471 = vmatprep.subr.bf16.mxu0 0
      %472 = vmatpush1.bf16.msra.mxu0 0
      %473 = vmatprep.subr.bf16.mxu0 0
      %474 = vmatpush1.bf16.msra.mxu0 0
      %475 = vmatprep.subr.bf16.mxu0 0
      %476 = vmatpush1.bf16.msra.mxu0 0
      %477 = vmatprep.subr.bf16.mxu0 0
      %478 = vmatpush1.bf16.msra.mxu0 0
      %479 = vmatprep.subr.bf16.mxu0 0
      %480 = vmatpush1.bf16.msra.mxu0 0
      %481 = vmatprep.subr.bf16.mxu0 0
      %482 = vmatpush1.bf16.msra.mxu0 0
      %483 = vmatprep.subr.bf16.mxu0 0
      %484 = vmatpush1.bf16.msra.mxu0 0
      %485 = vmatprep.subr.bf16.mxu0 0
      %486 = vmatpush1.bf16.msra.mxu0 0
      %487 = vmatprep.subr.bf16.mxu0 0
      %488 = vmatpush1.bf16.msra.mxu0 0
      %489 = vmatprep.subr.bf16.mxu0 0
      %490 = vmatpush1.bf16.msra.mxu0 0
      %491 = vmatprep.subr.bf16.mxu0 0
      %492 = vmatpush1.bf16.msra.mxu0 0
      %493 = vmatprep.mubr.bf16.mxu0 0
      %494 = vmatmul.mubr.bf16.gmra.mrb[0].mxu0 %v455
      %v495 = vpop.f32.mrb[0].mxu0
      %v496 = vadd.f32 %v451, %v495
      %v497 = vpop.f32.mrb[0].mxu0
      %v498 = vpop.f32.mrb[0].mxu0
      %v499 = vadd.f32 %v451, %v498
      %v500 = vpop.f32.mrb[0].mxu0
      %501 = vdwg.mxu0
      %v504 = vrot.slane %v496, 6
      %v505 = vrot.slane %v499, 6
      %v506 = vsel %vm457, %v504, %v505
      %v510 = vsel %vm457, 0.0, %v504
      %v511 = vsel %vm457, %v505, 0.0
      %vm514 = vcmask 1046528
      %v515 = vrot.slane %v510, 1
      %v516 = vrot.slane %v506, 1
      %v517 = vsel %vm514, %v515, %v516
      %v518 = vrot.slane %v511, 1
      %v519 = vsel %vm514, %v516, %v518
      %520 = vrot.lane.b32.xlu0 %v517, 32
      %v521 = vpop.permute.xlu0 %520
      %522 = vrot.lane.b32.xlu0 %v519, 32
      %v523 = vpop.permute.xlu0 %522
      %vm526 = vcmask 1045504
      %v527 = vrot.slane %v510, 2
      %v528 = vrot.slane %v506, 2
      %v529 = vsel %vm526, %v527, %v528
      %v530 = vrot.slane %v511, 2
      %v531 = vsel %vm526, %v528, %v530
      %532 = vrot.lane.b32.xlu0 %v529, 64
      %v533 = vpop.permute.xlu0 %532
      %534 = vrot.lane.b32.xlu0 %v531, 64
      %v535 = vpop.permute.xlu0 %534
      %vm538 = vcmask 1044480
      %v539 = vrot.slane %v510, 3
      %v540 = vrot.slane %v506, 3
      %v541 = vsel %vm538, %v539, %v540
      %v542 = vrot.slane %v511, 3
      %v543 = vsel %vm538, %v540, %v542
      %544 = vrot.lane.b32.xlu0 %v541, 96
      %v545 = vpop.permute.xlu0 %544
      %546 = vrot.lane.b32.xlu0 %v543, 96
      %v547 = vpop.permute.xlu0 %546
      %vm550 = vcmask 1043456
      %v551 = vrot.slane %v510, 4
      %v552 = vrot.slane %v506, 4
      %v553 = vsel %vm550, %v551, %v552
      %v554 = vrot.slane %v511, 4
      %v555 = vsel %vm550, %v552, %v554
      %vm558 = vcmask 261120
      %v559 = vsel %vm558, %v510, %v521
      %v560 = vsel %vm558, %v506, %v523
      %vm561 = vcmask 523264
      %v562 = vsel %vm561, %v559, %v533
      %v563 = vsel %vm561, %v560, %v535
      %vm564 = vcmask 785408
      %v565 = vsel %vm564, %v562, %v545
      %v566 = vsel %vm564, %v563, %v547
      %v567 = vpack.c.bf16 %v566, %v565
      %v568 = vpack.c.bf16 %v555, %v553
      %v569 = vld [vmem:[%s3] sm:$0xf]
      %v570 = vld [vmem:[%s3 + $0x4] sm:$0xf]
      %v571 = vld [vmem:[%s3 + $0x8] sm:$0xf]
      %v572 = vld [vmem:[%s3 + $0xc] sm:$0xf]
      %v573 = vld [vmem:[%s3 + $0x10] sm:$0xf]
      %v574 = vld [vmem:[%s3 + $0x14] sm:$0xf]
      %v575 = vld [vmem:[%s3 + $0x18] sm:$0xf]
      %v576 = vld [vmem:[%s3 + $0x1c] sm:$0xf]
      %v577 = vld [vmem:[%s3 + $0x20] sm:$0xf]
      %v578 = vld [vmem:[%s3 + $0x24] sm:$0xf]
      %v579 = vld [vmem:[%s3 + $0x28] sm:$0xf]
      %v580 = vld [vmem:[%s3 + $0x2c] sm:$0xf]
      %v581 = vld [vmem:[%s3 + $0x30] sm:$0xf]
      %v582 = vld [vmem:[%s3 + $0x34] sm:$0xf]
      %v583 = vld [vmem:[%s3 + $0x38] sm:$0xf]
      %v584 = vld [vmem:[%s3 + $0x3c] sm:$0xf]
      %v585 = vld [vmem:[%s3 + $0x40] sm:$0xf]
      %v586 = vld [vmem:[%s3 + $0x44] sm:$0xf]
      %v587 = vld [vmem:[%s3 + $0x48] sm:$0xf]
      %v588 = vld [vmem:[%s3 + $0x4c] sm:$0xf]
      %v589 = vld [vmem:[%s4] sm:$0x1]
      %v591 = vlaneseq
      %v592 = vshrl.u32 %v591, 7
      %v593 = vsub.s32 0, %v592
      %v594 = vrot.slane %v589, %v593
      %v616 = vunpack.c.l.b16 %v569
      %v617 = vunpack.c.l.b16 %v570
      %v618 = vunpack.c.l.b16 %v571
      %v619 = vunpack.c.l.b16 %v572
      %v620 = vunpack.c.l.b16 %v573
      %v621 = vunpack.c.l.b16 %v574
      %v622 = vunpack.c.l.b16 %v575
      %v623 = vunpack.c.l.b16 %v576
      %v624 = vunpack.c.l.b16 %v577
      %v625 = vunpack.c.l.b16 %v578
      %v626 = vunpack.c.l.b16 %v579
      %v627 = vunpack.c.l.b16 %v580
      %v628 = vunpack.c.l.b16 %v581
      %v629 = vunpack.c.l.b16 %v582
      %v630 = vunpack.c.l.b16 %v583
      %v631 = vunpack.c.l.b16 %v584
      %v632 = vunpack.c.l.b16 %v585
      %v633 = vunpack.c.l.b16 %v586
      %v634 = vunpack.c.l.b16 %v587
      %v635 = vunpack.c.l.b16 %v588
      %v636 = vpack.c.b16 %v617, %v616
      %v637 = vpack.c.b16 %v619, %v618
      %v638 = vpack.c.b16 %v621, %v620
      %v639 = vpack.c.b16 %v623, %v622
      %v640 = vpack.c.b16 %v625, %v624
      %v641 = vpack.c.b16 %v627, %v626
      %v642 = vpack.c.b16 %v629, %v628
      %v643 = vpack.c.b16 %v631, %v630
      %v644 = vpack.c.b16 %v633, %v632
      %v645 = vpack.c.b16 %v635, %v634
      %v657 = vsel %vm558, %v568, 0
      %659 = vmatprep.subr.bf16.mxu0 0
      %660 = vmatpush1.bf16.msra.mxu0 %v636
      %661 = vmatprep.subr.bf16.mxu0 0
      %662 = vmatpush1.bf16.msra.mxu0 %v637
      %663 = vmatprep.subr.bf16.mxu0 0
      %664 = vmatpush1.bf16.msra.mxu0 %v638
      %665 = vmatprep.subr.bf16.mxu0 0
      %666 = vmatpush1.bf16.msra.mxu0 %v639
      %667 = vmatprep.subr.bf16.mxu0 0
      %668 = vmatpush1.bf16.msra.mxu0 %v640
      %669 = vmatprep.subr.bf16.mxu0 0
      %670 = vmatpush1.bf16.msra.mxu0 %v641
      %671 = vmatprep.subr.bf16.mxu0 0
      %672 = vmatpush1.bf16.msra.mxu0 %v642
      %673 = vmatprep.subr.bf16.mxu0 0
      %674 = vmatpush1.bf16.msra.mxu0 %v643
      %675 = vmatprep.subr.bf16.mxu0 0
      %676 = vmatpush1.bf16.msra.mxu0 %v644
      %677 = vmatprep.subr.bf16.mxu0 0
      %678 = vmatpush1.bf16.msra.mxu0 %v645
      %679 = vmatprep.subr.bf16.mxu0 0
      %680 = vmatpush1.bf16.msra.mxu0 0
      %681 = vmatprep.subr.bf16.mxu0 0
      %682 = vmatpush1.bf16.msra.mxu0 0
      %683 = vmatprep.subr.bf16.mxu0 0
      %684 = vmatpush1.bf16.msra.mxu0 0
      %685 = vmatprep.subr.bf16.mxu0 0
      %686 = vmatpush1.bf16.msra.mxu0 0
      %687 = vmatprep.subr.bf16.mxu0 0
      %688 = vmatpush1.bf16.msra.mxu0 0
      %689 = vmatprep.subr.bf16.mxu0 0
      %690 = vmatpush1.bf16.msra.mxu0 0
      %691 = vmatprep.mubr.bf16.mxu0 %v657
      %692 = vmatmul.mubr.bf16.gmra.mrb[0].mxu0 %v567
      %v693 = vpop.f32.mrb[0].mxu0
      %v694 = vadd.f32 %v594, %v693
      %v695 = vpop.f32.mrb[0].mxu0
      %v696 = vpop.f32.mrb[0].mxu0
      %v697 = vadd.f32 %v594, %v696
      %v698 = vpop.f32.mrb[0].mxu0
      %699 = vdwg.mxu0
      %v702 = vcombine.high %v694, %v694
      %v704 = vunpack.c.l.s4 1983009808
      %v705 = vunpack.c.0.s8 %v704
      %v706 = vlaneseq
      %v707 = vshrl.u32 %v706, 7
      %v708 = vsub.s32 %v705, %v707
      %v709 = vrot.slane %v694, %v708
      %v711 = vunpack.c.l.s4 1983009808
      %v712 = vunpack.c.0.s8 %v711
      %v713 = vlaneseq
      %v714 = vshrl.u32 %v713, 7
      %v715 = vsub.s32 %v712, %v714
      %v716 = vrot.slane %v702, %v715
      %v717 = vcombine.high %v709, %v709
      %v718 = vcombine.high %v716, %v716
      %v719 = vcombine.high %v697, %v697
      %v721 = vunpack.c.l.s4 1983009808
      %v722 = vunpack.c.0.s8 %v721
      %v723 = vlaneseq
      %v724 = vshrl.u32 %v723, 7
      %v725 = vsub.s32 %v722, %v724
      %v726 = vrot.slane %v697, %v725
      %v728 = vunpack.c.l.s4 1983009808
      %v729 = vunpack.c.0.s8 %v728
      %v730 = vlaneseq
      %v731 = vshrl.u32 %v730, 7
      %v732 = vsub.s32 %v729, %v731
      %v733 = vrot.slane %v719, %v732
      %v734 = vcombine.high %v726, %v726
      %v735 = vcombine.high %v733, %v733
      %vm744 = vcmask 254976
      %v745 = vsel %vm744, %v709, -inf
      %v746 = vrot.slane %v745, 4
      %v747 = vmax.f32 %v745, %v746
      %v748 = vrot.slane %v747, 2
      %v749 = vmax.f32 %v747, %v748
      %v750 = vrot.slane %v749, 1
      %v751 = vmax.f32 %v749, %v750
      %v752 = vsel %vm744, %v717, -inf
      %v753 = vrot.slane %v752, 4
      %v754 = vmax.f32 %v752, %v753
      %v755 = vrot.slane %v754, 2
      %v756 = vmax.f32 %v754, %v755
      %v757 = vrot.slane %v756, 1
      %v758 = vmax.f32 %v756, %v757
      %v759 = vsel %vm744, %v716, -inf
      %v760 = vrot.slane %v759, 4
      %v761 = vmax.f32 %v759, %v760
      %v762 = vrot.slane %v761, 2
      %v763 = vmax.f32 %v761, %v762
      %v764 = vrot.slane %v763, 1
      %v765 = vmax.f32 %v763, %v764
      %v766 = vsel %vm744, %v718, -inf
      %v767 = vrot.slane %v766, 4
      %v768 = vmax.f32 %v766, %v767
      %v769 = vrot.slane %v768, 2
      %v770 = vmax.f32 %v768, %v769
      %v771 = vrot.slane %v770, 1
      %v772 = vmax.f32 %v770, %v771
      %v773 = vsel %vm744, %v726, -inf
      %v774 = vrot.slane %v773, 4
      %v775 = vmax.f32 %v773, %v774
      %v776 = vrot.slane %v775, 2
      %v777 = vmax.f32 %v775, %v776
      %v778 = vrot.slane %v777, 1
      %v779 = vmax.f32 %v777, %v778
      %v780 = vsel %vm744, %v734, -inf
      %v781 = vrot.slane %v780, 4
      %v782 = vmax.f32 %v780, %v781
      %v783 = vrot.slane %v782, 2
      %v784 = vmax.f32 %v782, %v783
      %v785 = vrot.slane %v784, 1
      %v786 = vmax.f32 %v784, %v785
      %v787 = vsel %vm744, %v733, -inf
      %v788 = vrot.slane %v787, 4
      %v789 = vmax.f32 %v787, %v788
      %v790 = vrot.slane %v789, 2
      %v791 = vmax.f32 %v789, %v790
      %v792 = vrot.slane %v791, 1
      %v793 = vmax.f32 %v791, %v792
      %v794 = vsel %vm744, %v735, -inf
      %v795 = vrot.slane %v794, 4
      %v796 = vmax.f32 %v794, %v795
      %v797 = vrot.slane %v796, 2
      %v798 = vmax.f32 %v796, %v797
      %v799 = vrot.slane %v798, 1
      %v800 = vmax.f32 %v798, %v799
      %vm809 = vcmask 1043459
      %v810 = vsel %vm809, %v758, %v751
      %vm811 = vcmask 1044484
      %v812 = vsel %vm811, %v765, %v810
      %vm813 = vcmask 1045509
      %v814 = vsel %vm813, %v772, %v812
      %vm815 = vcmask 1046534
      %v816 = vsel %vm815, %v779, %v814
      %vm817 = vcmask 1047559
      %v818 = vsel %vm817, %v786, %v816
      %vm819 = vcmask 1041409
      %v820 = vsel %vm819, %v800, %v793
      %v823 = vsel %vm457, 0.0, %v818
      %v824 = vsel %vm457, %v820, 0.0
      %v827 = vrot.slane %v823, 1
      %v828 = vrot.slane %v824, 1
      %v829 = vsel %vm514, %v827, %v828
      %830 = vrot.lane.b32.xlu0 %v829, 32
      %v831 = vpop.permute.xlu0 %830
      %v833 = vrot.slane %v823, 2
      %v834 = vrot.slane %v824, 2
      %v835 = vsel %vm526, %v833, %v834
      %836 = vrot.lane.b32.xlu0 %v835, 64
      %v837 = vpop.permute.xlu0 %836
      %v839 = vrot.slane %v823, 3
      %v840 = vrot.slane %v824, 3
      %v841 = vsel %vm538, %v839, %v840
      %842 = vrot.lane.b32.xlu0 %v841, 96
      %v843 = vpop.permute.xlu0 %842
      %v845 = vrot.slane %v823, 4
      %v846 = vrot.slane %v824, 4
      %v847 = vsel %vm550, %v845, %v846
      %v849 = vsel %vm558, %v823, %v831
      %v850 = vsel %vm561, %v849, %v837
      %v851 = vsel %vm564, %v850, %v843
      %v852 = vpack.c.bf16 %v851, %v851
      %v853 = vpack.c.bf16 %v847, %v847
      %v854 = vld [vmem:[%s5] sm:$0xf]
      %v855 = vld [vmem:[%s5 + $0x4] sm:$0xf]
      %v856 = vld [vmem:[%s5 + $0x8] sm:$0xf]
      %v857 = vld [vmem:[%s5 + $0xc] sm:$0xf]
      %v858 = vld [vmem:[%s5 + $0x10] sm:$0xf]
      %v859 = vld [vmem:[%s5 + $0x14] sm:$0xf]
      %v860 = vld [vmem:[%s5 + $0x18] sm:$0xf]
      %v861 = vld [vmem:[%s5 + $0x1c] sm:$0xf]
      %v862 = vld [vmem:[%s5 + $0x20] sm:$0xf]
      %v863 = vld [vmem:[%s5 + $0x24] sm:$0xf]
      %v864 = vld [vmem:[%s5 + $0x28] sm:$0xf]
      %v865 = vld [vmem:[%s5 + $0x2c] sm:$0xf]
      %v866 = vld [vmem:[%s5 + $0x30] sm:$0xf]
      %v867 = vld [vmem:[%s5 + $0x34] sm:$0xf]
      %v868 = vld [vmem:[%s5 + $0x38] sm:$0xf]
      %v869 = vld [vmem:[%s5 + $0x3c] sm:$0xf]
      %v870 = vld [vmem:[%s5 + $0x40] sm:$0xf]
      %v871 = vld [vmem:[%s5 + $0x44] sm:$0xf]
      %v872 = vld [vmem:[%s5 + $0x48] sm:$0xf]
      %v873 = vld [vmem:[%s5 + $0x4c] sm:$0xf]
      %v874 = vld [vmem:[%s6] sm:$0x1]
      %v876 = vlaneseq
      %v877 = vshrl.u32 %v876, 7
      %v878 = vsub.s32 0, %v877
      %v879 = vrot.slane %v874, %v878
      %v901 = vunpack.c.l.b16 %v854
      %v902 = vunpack.c.l.b16 %v855
      %v903 = vunpack.c.l.b16 %v856
      %v904 = vunpack.c.l.b16 %v857
      %v905 = vunpack.c.l.b16 %v858
      %v906 = vunpack.c.l.b16 %v859
      %v907 = vunpack.c.l.b16 %v860
      %v908 = vunpack.c.l.b16 %v861
      %v909 = vunpack.c.l.b16 %v862
      %v910 = vunpack.c.l.b16 %v863
      %v911 = vunpack.c.l.b16 %v864
      %v912 = vunpack.c.l.b16 %v865
      %v913 = vunpack.c.l.b16 %v866
      %v914 = vunpack.c.l.b16 %v867
      %v915 = vunpack.c.l.b16 %v868
      %v916 = vunpack.c.l.b16 %v869
      %v917 = vunpack.c.l.b16 %v870
      %v918 = vunpack.c.l.b16 %v871
      %v919 = vunpack.c.l.b16 %v872
      %v920 = vunpack.c.l.b16 %v873
      %v921 = vpack.c.b16 %v902, %v901
      %v922 = vpack.c.b16 %v904, %v903
      %v923 = vpack.c.b16 %v906, %v905
      %v924 = vpack.c.b16 %v908, %v907
      %v925 = vpack.c.b16 %v910, %v909
      %v926 = vpack.c.b16 %v912, %v911
      %v927 = vpack.c.b16 %v914, %v913
      %v928 = vpack.c.b16 %v916, %v915
      %v929 = vpack.c.b16 %v918, %v917
      %v930 = vpack.c.b16 %v920, %v919
      %v942 = vsel %vm558, %v853, 0
      %944 = vmatprep.subr.bf16.mxu0 0
      %945 = vmatpush1.bf16.msra.mxu0 %v921
      %946 = vmatprep.subr.bf16.mxu0 0
      %947 = vmatpush1.bf16.msra.mxu0 %v922
      %948 = vmatprep.subr.bf16.mxu0 0
      %949 = vmatpush1.bf16.msra.mxu0 %v923
      %950 = vmatprep.subr.bf16.mxu0 0
      %951 = vmatpush1.bf16.msra.mxu0 %v924
      %952 = vmatprep.subr.bf16.mxu0 0
      %953 = vmatpush1.bf16.msra.mxu0 %v925
      %954 = vmatprep.subr.bf16.mxu0 0
      %955 = vmatpush1.bf16.msra.mxu0 %v926
      %956 = vmatprep.subr.bf16.mxu0 0
      %957 = vmatpush1.bf16.msra.mxu0 %v927
      %958 = vmatprep.subr.bf16.mxu0 0
      %959 = vmatpush1.bf16.msra.mxu0 %v928
      %960 = vmatprep.subr.bf16.mxu0 0
      %961 = vmatpush1.bf16.msra.mxu0 %v929
      %962 = vmatprep.subr.bf16.mxu0 0
      %963 = vmatpush1.bf16.msra.mxu0 %v930
      %964 = vmatprep.subr.bf16.mxu0 0
      %965 = vmatpush1.bf16.msra.mxu0 0
      %966 = vmatprep.subr.bf16.mxu0 0
      %967 = vmatpush1.bf16.msra.mxu0 0
      %968 = vmatprep.subr.bf16.mxu0 0
      %969 = vmatpush1.bf16.msra.mxu0 0
      %970 = vmatprep.subr.bf16.mxu0 0
      %971 = vmatpush1.bf16.msra.mxu0 0
      %972 = vmatprep.subr.bf16.mxu0 0
      %973 = vmatpush1.bf16.msra.mxu0 0
      %974 = vmatprep.subr.bf16.mxu0 0
      %975 = vmatpush1.bf16.msra.mxu0 0
      %976 = vmatprep.mubr.bf16.mxu0 %v942
      %977 = vmatmul.mubr.bf16.gmra.mrb[0].mxu0 %v852
      %v978 = vpop.f32.mrb[0].mxu0
      %v979 = vadd.f32 %v879, %v978
      %v980 = vpop.f32.mrb[0].mxu0
      %v981 = vpop.f32.mrb[0].mxu0
      %v982 = vpop.f32.mrb[0].mxu0
      %983 = vdwg.mxu0
      %v985 = vcombine.high %v979, %v979
      %v987 = vunpack.c.l.s4 1983009808
      %v988 = vunpack.c.0.s8 %v987
      %v989 = vlaneseq
      %v990 = vshrl.u32 %v989, 7
      %v991 = vsub.s32 %v988, %v990
      %v992 = vrot.slane %v979, %v991
      %v994 = vunpack.c.l.s4 1983009808
      %v995 = vunpack.c.0.s8 %v994
      %v996 = vlaneseq
      %v997 = vshrl.u32 %v996, 7
      %v998 = vsub.s32 %v995, %v997
      %v999 = vrot.slane %v985, %v998
      %v1000 = vcombine.high %v992, %v992
      %v1001 = vcombine.high %v999, %v999
      %v1006 = vsel %vm744, %v992, -inf
      %v1007 = vrot.slane %v1006, 4
      %v1008 = vmax.f32 %v1006, %v1007
      %v1009 = vrot.slane %v1008, 2
      %v1010 = vmax.f32 %v1008, %v1009
      %v1011 = vrot.slane %v1010, 1
      %v1012 = vmax.f32 %v1010, %v1011
      %v1013 = vsel %vm744, %v1000, -inf
      %v1014 = vrot.slane %v1013, 4
      %v1015 = vmax.f32 %v1013, %v1014
      %v1016 = vrot.slane %v1015, 2
      %v1017 = vmax.f32 %v1015, %v1016
      %v1018 = vrot.slane %v1017, 1
      %v1019 = vmax.f32 %v1017, %v1018
      %v1020 = vsel %vm744, %v999, -inf
      %v1021 = vrot.slane %v1020, 4
      %v1022 = vmax.f32 %v1020, %v1021
      %v1023 = vrot.slane %v1022, 2
      %v1024 = vmax.f32 %v1022, %v1023
      %v1025 = vrot.slane %v1024, 1
      %v1026 = vmax.f32 %v1024, %v1025
      %v1027 = vsel %vm744, %v1001, -inf
      %v1028 = vrot.slane %v1027, 4
      %v1029 = vmax.f32 %v1027, %v1028
      %v1030 = vrot.slane %v1029, 2
      %v1031 = vmax.f32 %v1029, %v1030
      %v1032 = vrot.slane %v1031, 1
      %v1033 = vmax.f32 %v1031, %v1032
      %v1038 = vsel %vm809, %v1019, %v1012
      %v1039 = vsel %vm811, %v1026, %v1038
      %v1040 = vsel %vm813, %v1033, %v1039
      %v1042 = vsel %vm457, 0.0, %v1040
      %v1043 = vsel %vm526, %v1042, 0.0
      %v1045 = vrot.slane %v1043, 1
      %1046 = vrot.lane.b32.xlu0 %v1045, 32
      %v1047 = vpop.permute.xlu0 %1046
      %v1049 = vrot.slane %v1043, 2
      %1050 = vrot.lane.b32.xlu0 %v1049, 64
      %v1051 = vpop.permute.xlu0 %1050
      %v1053 = vrot.slane %v1043, 3
      %1054 = vrot.lane.b32.xlu0 %v1053, 96
      %v1055 = vpop.permute.xlu0 %1054
      %v1057 = vrot.slane %v1043, 4
      %v1059 = vsel %vm558, %v1043, %v1047
      %v1060 = vsel %vm561, %v1059, %v1051
      %v1061 = vsel %vm564, %v1060, %v1055
      %v1062 = vpack.c.bf16 %v1061, %v1061
      %v1063 = vpack.c.bf16 %v1057, %v1057
      %v1064 = vld [vmem:[%s7] sm:$0xf]
      %v1065 = vld [vmem:[%s7 + $0x4] sm:$0xf]
      %v1066 = vld [vmem:[%s7 + $0x8] sm:$0xf]
      %v1067 = vld [vmem:[%s7 + $0xc] sm:$0xf]
      %v1068 = vld [vmem:[%s7 + $0x10] sm:$0xf]
      %v1069 = vld [vmem:[%s7 + $0x14] sm:$0xf]
      %v1070 = vld [vmem:[%s7 + $0x18] sm:$0xf]
      %v1071 = vld [vmem:[%s7 + $0x1c] sm:$0xf]
      %v1072 = vld [vmem:[%s7 + $0x20] sm:$0xf]
      %v1073 = vld [vmem:[%s7 + $0x24] sm:$0xf]
      %v1074 = vld [vmem:[%s7 + $0x28] sm:$0xf]
      %v1075 = vld [vmem:[%s7 + $0x2c] sm:$0xf]
      %v1076 = vld [vmem:[%s7 + $0x30] sm:$0xf]
      %v1077 = vld [vmem:[%s7 + $0x34] sm:$0xf]
      %v1078 = vld [vmem:[%s7 + $0x38] sm:$0xf]
      %v1079 = vld [vmem:[%s7 + $0x3c] sm:$0xf]
      %v1080 = vld [vmem:[%s7 + $0x40] sm:$0xf]
      %v1081 = vld [vmem:[%s7 + $0x44] sm:$0xf]
      %v1082 = vld [vmem:[%s7 + $0x48] sm:$0xf]
      %v1083 = vld [vmem:[%s7 + $0x4c] sm:$0xf]
      %v1084 = vld [vmem:[%s8] sm:$0x1]
      %v1086 = vlaneseq
      %v1087 = vshrl.u32 %v1086, 7
      %v1088 = vsub.s32 0, %v1087
      %v1089 = vrot.slane %v1084, %v1088
      %v1111 = vunpack.c.l.b16 %v1064
      %v1112 = vunpack.c.l.b16 %v1065
      %v1113 = vunpack.c.l.b16 %v1066
      %v1114 = vunpack.c.l.b16 %v1067
      %v1115 = vunpack.c.l.b16 %v1068
      %v1116 = vunpack.c.l.b16 %v1069
      %v1117 = vunpack.c.l.b16 %v1070
      %v1118 = vunpack.c.l.b16 %v1071
      %v1119 = vunpack.c.l.b16 %v1072
      %v1120 = vunpack.c.l.b16 %v1073
      %v1121 = vunpack.c.l.b16 %v1074
      %v1122 = vunpack.c.l.b16 %v1075
      %v1123 = vunpack.c.l.b16 %v1076
      %v1124 = vunpack.c.l.b16 %v1077
      %v1125 = vunpack.c.l.b16 %v1078
      %v1126 = vunpack.c.l.b16 %v1079
      %v1127 = vunpack.c.l.b16 %v1080
      %v1128 = vunpack.c.l.b16 %v1081
      %v1129 = vunpack.c.l.b16 %v1082
      %v1130 = vunpack.c.l.b16 %v1083
      %v1131 = vpack.c.b16 %v1112, %v1111
      %v1132 = vpack.c.b16 %v1114, %v1113
      %v1133 = vpack.c.b16 %v1116, %v1115
      %v1134 = vpack.c.b16 %v1118, %v1117
      %v1135 = vpack.c.b16 %v1120, %v1119
      %v1136 = vpack.c.b16 %v1122, %v1121
      %v1137 = vpack.c.b16 %v1124, %v1123
      %v1138 = vpack.c.b16 %v1126, %v1125
      %v1139 = vpack.c.b16 %v1128, %v1127
      %v1140 = vpack.c.b16 %v1130, %v1129
      %v1152 = vsel %vm558, %v1063, 0
      %1154 = vmatprep.subr.bf16.mxu0 0
      %1155 = vmatpush1.bf16.msra.mxu0 %v1131
      %1156 = vmatprep.subr.bf16.mxu0 0
      %1157 = vmatpush1.bf16.msra.mxu0 %v1132
      %1158 = vmatprep.subr.bf16.mxu0 0
      %1159 = vmatpush1.bf16.msra.mxu0 %v1133
      %1160 = vmatprep.subr.bf16.mxu0 0
      %1161 = vmatpush1.bf16.msra.mxu0 %v1134
      %1162 = vmatprep.subr.bf16.mxu0 0
      %1163 = vmatpush1.bf16.msra.mxu0 %v1135
      %1164 = vmatprep.subr.bf16.mxu0 0
      %1165 = vmatpush1.bf16.msra.mxu0 %v1136
      %1166 = vmatprep.subr.bf16.mxu0 0
      %1167 = vmatpush1.bf16.msra.mxu0 %v1137
      %1168 = vmatprep.subr.bf16.mxu0 0
      %1169 = vmatpush1.bf16.msra.mxu0 %v1138
      %1170 = vmatprep.subr.bf16.mxu0 0
      %1171 = vmatpush1.bf16.msra.mxu0 %v1139
      %1172 = vmatprep.subr.bf16.mxu0 0
      %1173 = vmatpush1.bf16.msra.mxu0 %v1140
      %1174 = vmatprep.subr.bf16.mxu0 0
      %1175 = vmatpush1.bf16.msra.mxu0 0
      %1176 = vmatprep.subr.bf16.mxu0 0
      %1177 = vmatpush1.bf16.msra.mxu0 0
      %1178 = vmatprep.subr.bf16.mxu0 0
      %1179 = vmatpush1.bf16.msra.mxu0 0
      %1180 = vmatprep.subr.bf16.mxu0 0
      %1181 = vmatpush1.bf16.msra.mxu0 0
      %1182 = vmatprep.subr.bf16.mxu0 0
      %1183 = vmatpush1.bf16.msra.mxu0 0
      %1184 = vmatprep.subr.bf16.mxu0 0
      %1185 = vmatpush1.bf16.msra.mxu0 0
      %1186 = vmatprep.mubr.bf16.mxu0 %v1152
      %1187 = vmatmul.mubr.bf16.gmra.mrb[0].mxu0 %v1062
      %v1188 = vpop.f32.mrb[0].mxu0
      %v1189 = vadd.f32 %v1089, %v1188
      %v1190 = vpop.f32.mrb[0].mxu0
      %v1191 = vpop.f32.mrb[0].mxu0
      %v1192 = vpop.f32.mrb[0].mxu0
      %1193 = vdwg.mxu0
      %v1196 = vunpack.c.l.s4 1966171168
      %v1197 = vunpack.c.0.s8 %v1196
      %v1198 = vlaneseq
      %v1199 = vshrl.u32 %v1198, 7
      %v1200 = vsub.s32 %v1197, %v1199
      %v1201 = vrot.slane %v1189, %v1200
      %v1202 = vcombine.high %v1201, %v1201
      %v1204 = vunpack.c.l.s4 1966171168
      %v1205 = vunpack.c.0.s8 %v1204
      %v1206 = vlaneseq
      %v1207 = vshrl.u32 %v1206, 7
      %v1208 = vsub.s32 %v1205, %v1207
      %v1209 = vrot.slane %v1201, %v1208
      %v1211 = vunpack.c.l.s4 1966171168
      %v1212 = vunpack.c.0.s8 %v1211
      %v1213 = vlaneseq
      %v1214 = vshrl.u32 %v1213, 7
      %v1215 = vsub.s32 %v1212, %v1214
      %v1216 = vrot.slane %v1202, %v1215
      %v1217 = vcombine.high %v1209, %v1209
      %v1218 = vcombine.high %v1216, %v1216
      %v1219 = vlaneseq
      %v1220 = vshrl.u32 %v1219, 7
      %v1221 = vsub.s32 0, %v1220
      %v1222 = vrot.slane %v1209, %v1221
      %v1223 = vlaneseq
      %v1224 = vshrl.u32 %v1223, 7
      %v1225 = vsub.s32 0, %v1224
      %v1226 = vrot.slane %v1216, %v1225
      %v1227 = vlaneseq
      %v1228 = vshrl.u32 %v1227, 7
      %v1229 = vsub.s32 0, %v1228
      %v1230 = vrot.slane %v1217, %v1229
      %v1231 = vlaneseq
      %v1232 = vshrl.u32 %v1231, 7
      %v1233 = vsub.s32 0, %v1232
      %v1234 = vrot.slane %v1218, %v1233
      %v1240 = vunpack.c.l.s4 1983009808
      %v1241 = vunpack.c.0.s8 %v1240
      %v1242 = vlaneseq
      %v1243 = vshrl.u32 %v1242, 7
      %v1244 = vsub.s32 %v1241, %v1243
      %v1245 = vrot.slane %v751, %v1244
      %v1247 = vunpack.c.l.s4 1983009808
      %v1248 = vunpack.c.0.s8 %v1247
      %v1249 = vlaneseq
      %v1250 = vshrl.u32 %v1249, 7
      %v1251 = vsub.s32 %v1248, %v1250
      %v1252 = vrot.slane %v758, %v1251
      %v1254 = vunpack.c.l.s4 1983009808
      %v1255 = vunpack.c.0.s8 %v1254
      %v1256 = vlaneseq
      %v1257 = vshrl.u32 %v1256, 7
      %v1258 = vsub.s32 %v1255, %v1257
      %v1259 = vrot.slane %v765, %v1258
      %v1261 = vunpack.c.l.s4 1983009808
      %v1262 = vunpack.c.0.s8 %v1261
      %v1263 = vlaneseq
      %v1264 = vshrl.u32 %v1263, 7
      %v1265 = vsub.s32 %v1262, %v1264
      %v1266 = vrot.slane %v772, %v1265
      %v1268 = vunpack.c.l.s4 1983009808
      %v1269 = vunpack.c.0.s8 %v1268
      %v1270 = vlaneseq
      %v1271 = vshrl.u32 %v1270, 7
      %v1272 = vsub.s32 %v1269, %v1271
      %v1273 = vrot.slane %v779, %v1272
      %v1275 = vunpack.c.l.s4 1983009808
      %v1276 = vunpack.c.0.s8 %v1275
      %v1277 = vlaneseq
      %v1278 = vshrl.u32 %v1277, 7
      %v1279 = vsub.s32 %v1276, %v1278
      %v1280 = vrot.slane %v786, %v1279
      %v1282 = vunpack.c.l.s4 1983009808
      %v1283 = vunpack.c.0.s8 %v1282
      %v1284 = vlaneseq
      %v1285 = vshrl.u32 %v1284, 7
      %v1286 = vsub.s32 %v1283, %v1285
      %v1287 = vrot.slane %v793, %v1286
      %v1289 = vunpack.c.l.s4 1983009808
      %v1290 = vunpack.c.0.s8 %v1289
      %v1291 = vlaneseq
      %v1292 = vshrl.u32 %v1291, 7
      %v1293 = vsub.s32 %v1290, %v1292
      %v1294 = vrot.slane %v800, %v1293
      %v1295 = vsel %vm811, %v1245, %v1245
      %v1296 = vsel %vm815, %v1245, %v1295
      %v1297 = vrot.slane %v1252, 7
      %v1298 = vsel %vm819, %v1297, %v1296
      %v1299 = vsel %vm809, %v1297, %v1298
      %v1300 = vsel %vm813, %v1297, %v1299
      %v1301 = vsel %vm817, %v1297, %v1300
      %v1302 = vsel %vm811, %v1259, %v1259
      %v1303 = vsel %vm815, %v1259, %v1302
      %v1304 = vrot.slane %v1266, 7
      %v1305 = vsel %vm819, %v1304, %v1303
      %v1306 = vsel %vm809, %v1304, %v1305
      %v1307 = vsel %vm813, %v1304, %v1306
      %v1308 = vsel %vm817, %v1304, %v1307
      %v1309 = vsel %vm811, %v1273, %v1273
      %v1310 = vsel %vm815, %v1273, %v1309
      %v1311 = vrot.slane %v1280, 7
      %v1312 = vsel %vm819, %v1311, %v1310
      %v1313 = vsel %vm809, %v1311, %v1312
      %v1314 = vsel %vm813, %v1311, %v1313
      %v1315 = vsel %vm817, %v1311, %v1314
      %v1316 = vsel %vm811, %v1287, %v1287
      %v1317 = vsel %vm815, %v1287, %v1316
      %v1318 = vrot.slane %v1294, 7
      %v1319 = vsel %vm819, %v1318, %v1317
      %v1320 = vsel %vm809, %v1318, %v1319
      %v1321 = vsel %vm813, %v1318, %v1320
      %v1322 = vsel %vm817, %v1318, %v1321
      %v1327 = vadd.f32 %v1222, %v1301
      %v1328 = vadd.f32 %v1226, %v1308
      %v1329 = vadd.f32 %v1230, %v1315
      %v1330 = vadd.f32 %v1234, %v1322
      %v1335 = vcombine.low %v1327, %v1327
      %v1336 = vcombine.low %v1328, %v1329
      %v1338 = vunpack.c.l.s4 1983009808
      %v1339 = vunpack.c.0.s8 %v1338
      %v1340 = vlaneseq
      %v1341 = vshrl.u32 %v1340, 7
      %v1342 = vsub.s32 %v1339, %v1341
      %v1343 = vrot.slane %v1335, %v1342
      %v1345 = vunpack.c.l.s4 1983009808
      %v1346 = vunpack.c.0.s8 %v1345
      %v1347 = vlaneseq
      %v1348 = vshrl.u32 %v1347, 7
      %v1349 = vsub.s32 %v1346, %v1348
      %v1350 = vrot.slane %v1336, %v1349
      %v1351 = vcombine.low %v1343, %v1350
      %v1353 = vunpack.c.l.s4 1983009808
      %v1354 = vunpack.c.0.s8 %v1353
      %v1355 = vlaneseq
      %v1356 = vshrl.u32 %v1355, 7
      %v1357 = vsub.s32 %v1354, %v1356
      %v1358 = vrot.slane %v1330, %v1357
      %v1361 = vsel %vm457, 0.0, %v1351
      %v1362 = vsel %vm457, %v1358, 0.0
      %v1365 = vrot.slane %v1361, 1
      %v1366 = vrot.slane %v1362, 1
      %v1367 = vsel %vm514, %v1365, %v1366
      %1368 = vrot.lane.b32.xlu0 %v1367, 32
      %v1369 = vpop.permute.xlu0 %1368
      %v1371 = vrot.slane %v1361, 2
      %v1372 = vrot.slane %v1362, 2
      %v1373 = vsel %vm526, %v1371, %v1372
      %1374 = vrot.lane.b32.xlu0 %v1373, 64
      %v1375 = vpop.permute.xlu0 %1374
      %v1377 = vrot.slane %v1361, 3
      %v1378 = vrot.slane %v1362, 3
      %v1379 = vsel %vm538, %v1377, %v1378
      %1380 = vrot.lane.b32.xlu0 %v1379, 96
      %v1381 = vpop.permute.xlu0 %1380
      %v1383 = vrot.slane %v1361, 4
      %v1384 = vrot.slane %v1362, 4
      %v1385 = vsel %vm550, %v1383, %v1384
      %v1387 = vsel %vm558, %v1361, %v1369
      %v1388 = vsel %vm561, %v1387, %v1375
      %v1389 = vsel %vm564, %v1388, %v1381
      %v1390 = vpack.c.bf16 %v1389, %v1389
      %v1391 = vpack.c.bf16 %v1385, %v1385
      %v1392 = vld [vmem:[%s9] sm:$0xf]
      %v1393 = vld [vmem:[%s9 + $0x4] sm:$0xf]
      %v1394 = vld [vmem:[%s9 + $0x8] sm:$0xf]
      %v1395 = vld [vmem:[%s9 + $0xc] sm:$0xf]
      %v1396 = vld [vmem:[%s9 + $0x10] sm:$0xf]
      %v1397 = vld [vmem:[%s9 + $0x14] sm:$0xf]
      %v1398 = vld [vmem:[%s9 + $0x18] sm:$0xf]
      %v1399 = vld [vmem:[%s9 + $0x1c] sm:$0xf]
      %v1400 = vld [vmem:[%s9 + $0x20] sm:$0xf]
      %v1401 = vld [vmem:[%s9 + $0x24] sm:$0xf]
      %v1402 = vld [vmem:[%s9 + $0x28] sm:$0xf]
      %v1403 = vld [vmem:[%s9 + $0x2c] sm:$0xf]
      %v1404 = vld [vmem:[%s9 + $0x30] sm:$0xf]
      %v1405 = vld [vmem:[%s9 + $0x34] sm:$0xf]
      %v1406 = vld [vmem:[%s9 + $0x38] sm:$0xf]
      %v1407 = vld [vmem:[%s9 + $0x3c] sm:$0xf]
      %v1408 = vld [vmem:[%s9 + $0x40] sm:$0xf]
      %v1409 = vld [vmem:[%s9 + $0x44] sm:$0xf]
      %v1410 = vld [vmem:[%s9 + $0x48] sm:$0xf]
      %v1411 = vld [vmem:[%s9 + $0x4c] sm:$0xf]
      %v1412 = vld [vmem:[%s10] sm:$0x1]
      %v1414 = vlaneseq
      %v1415 = vshrl.u32 %v1414, 7
      %v1416 = vsub.s32 0, %v1415
      %v1417 = vrot.slane %v1412, %v1416
      %v1439 = vunpack.c.l.b16 %v1392
      %v1440 = vunpack.c.l.b16 %v1393
      %v1441 = vunpack.c.l.b16 %v1394
      %v1442 = vunpack.c.l.b16 %v1395
      %v1443 = vunpack.c.l.b16 %v1396
      %v1444 = vunpack.c.l.b16 %v1397
      %v1445 = vunpack.c.l.b16 %v1398
      %v1446 = vunpack.c.l.b16 %v1399
      %v1447 = vunpack.c.l.b16 %v1400
      %v1448 = vunpack.c.l.b16 %v1401
      %v1449 = vunpack.c.l.b16 %v1402
      %v1450 = vunpack.c.l.b16 %v1403
      %v1451 = vunpack.c.l.b16 %v1404
      %v1452 = vunpack.c.l.b16 %v1405
      %v1453 = vunpack.c.l.b16 %v1406
      %v1454 = vunpack.c.l.b16 %v1407
      %v1455 = vunpack.c.l.b16 %v1408
      %v1456 = vunpack.c.l.b16 %v1409
      %v1457 = vunpack.c.l.b16 %v1410
      %v1458 = vunpack.c.l.b16 %v1411
      %v1459 = vpack.c.b16 %v1440, %v1439
      %v1460 = vpack.c.b16 %v1442, %v1441
      %v1461 = vpack.c.b16 %v1444, %v1443
      %v1462 = vpack.c.b16 %v1446, %v1445
      %v1463 = vpack.c.b16 %v1448, %v1447
      %v1464 = vpack.c.b16 %v1450, %v1449
      %v1465 = vpack.c.b16 %v1452, %v1451
      %v1466 = vpack.c.b16 %v1454, %v1453
      %v1467 = vpack.c.b16 %v1456, %v1455
      %v1468 = vpack.c.b16 %v1458, %v1457
      %v1480 = vsel %vm558, %v1391, 0
      %1482 = vmatprep.subr.bf16.mxu0 0
      %1483 = vmatpush1.bf16.msra.mxu0 %v1459
      %1484 = vmatprep.subr.bf16.mxu0 0
      %1485 = vmatpush1.bf16.msra.mxu0 %v1460
      %1486 = vmatprep.subr.bf16.mxu0 0
      %1487 = vmatpush1.bf16.msra.mxu0 %v1461
      %1488 = vmatprep.subr.bf16.mxu0 0
      %1489 = vmatpush1.bf16.msra.mxu0 %v1462
      %1490 = vmatprep.subr.bf16.mxu0 0
      %1491 = vmatpush1.bf16.msra.mxu0 %v1463
      %1492 = vmatprep.subr.bf16.mxu0 0
      %1493 = vmatpush1.bf16.msra.mxu0 %v1464
      %1494 = vmatprep.subr.bf16.mxu0 0
      %1495 = vmatpush1.bf16.msra.mxu0 %v1465
      %1496 = vmatprep.subr.bf16.mxu0 0
      %1497 = vmatpush1.bf16.msra.mxu0 %v1466
      %1498 = vmatprep.subr.bf16.mxu0 0
      %1499 = vmatpush1.bf16.msra.mxu0 %v1467
      %1500 = vmatprep.subr.bf16.mxu0 0
      %1501 = vmatpush1.bf16.msra.mxu0 %v1468
      %1502 = vmatprep.subr.bf16.mxu0 0
      %1503 = vmatpush1.bf16.msra.mxu0 0
      %1504 = vmatprep.subr.bf16.mxu0 0
      %1505 = vmatpush1.bf16.msra.mxu0 0
      %1506 = vmatprep.subr.bf16.mxu0 0
      %1507 = vmatpush1.bf16.msra.mxu0 0
      %1508 = vmatprep.subr.bf16.mxu0 0
      %1509 = vmatpush1.bf16.msra.mxu0 0
      %1510 = vmatprep.subr.bf16.mxu0 0
      %1511 = vmatpush1.bf16.msra.mxu0 0
      %1512 = vmatprep.subr.bf16.mxu0 0
      %1513 = vmatpush1.bf16.msra.mxu0 0
      %1514 = vmatprep.mubr.bf16.mxu0 %v1480
      %1515 = vmatmul.mubr.bf16.gmra.mrb[0].mxu0 %v1390
      %v1516 = vpop.f32.mrb[0].mxu0
      %v1517 = vadd.f32 %v1417, %v1516
      %v1518 = vpop.f32.mrb[0].mxu0
      %v1519 = vpop.f32.mrb[0].mxu0
      %v1520 = vpop.f32.mrb[0].mxu0
      %1521 = vdwg.mxu0
      %v1523 = vcombine.high %v1517, %v1517
      %v1525 = vunpack.c.l.s4 1966171168
      %v1526 = vunpack.c.0.s8 %v1525
      %v1527 = vlaneseq
      %v1528 = vshrl.u32 %v1527, 7
      %v1529 = vsub.s32 %v1526, %v1528
      %v1530 = vrot.slane %v1517, %v1529
      %v1532 = vunpack.c.l.s4 1966171168
      %v1533 = vunpack.c.0.s8 %v1532
      %v1534 = vlaneseq
      %v1535 = vshrl.u32 %v1534, 7
      %v1536 = vsub.s32 %v1533, %v1535
      %v1537 = vrot.slane %v1523, %v1536
      %v1538 = vcombine.high %v1530, %v1530
      %v1539 = vcombine.high %v1537, %v1537
      %v1541 = vunpack.c.l.s4 1966171168
      %v1542 = vunpack.c.0.s8 %v1541
      %v1543 = vlaneseq
      %v1544 = vshrl.u32 %v1543, 7
      %v1545 = vsub.s32 %v1542, %v1544
      %v1546 = vrot.slane %v1530, %v1545
      %v1548 = vunpack.c.l.s4 1966171168
      %v1549 = vunpack.c.0.s8 %v1548
      %v1550 = vlaneseq
      %v1551 = vshrl.u32 %v1550, 7
      %v1552 = vsub.s32 %v1549, %v1551
      %v1553 = vrot.slane %v1537, %v1552
      %v1555 = vunpack.c.l.s4 1966171168
      %v1556 = vunpack.c.0.s8 %v1555
      %v1557 = vlaneseq
      %v1558 = vshrl.u32 %v1557, 7
      %v1559 = vsub.s32 %v1556, %v1558
      %v1560 = vrot.slane %v1538, %v1559
      %v1562 = vunpack.c.l.s4 1966171168
      %v1563 = vunpack.c.0.s8 %v1562
      %v1564 = vlaneseq
      %v1565 = vshrl.u32 %v1564, 7
      %v1566 = vsub.s32 %v1563, %v1565
      %v1567 = vrot.slane %v1539, %v1566
      %v1568 = vcombine.high %v1546, %v1546
      %v1569 = vcombine.high %v1553, %v1553
      %v1570 = vcombine.high %v1560, %v1560
      %v1571 = vcombine.high %v1567, %v1567
      %v1572 = vlaneseq
      %v1573 = vshrl.u32 %v1572, 7
      %v1574 = vsub.s32 0, %v1573
      %v1575 = vrot.slane %v1546, %v1574
      %v1576 = vlaneseq
      %v1577 = vshrl.u32 %v1576, 7
      %v1578 = vsub.s32 0, %v1577
      %v1579 = vrot.slane %v1560, %v1578
      %v1580 = vlaneseq
      %v1581 = vshrl.u32 %v1580, 7
      %v1582 = vsub.s32 0, %v1581
      %v1583 = vrot.slane %v1568, %v1582
      %v1584 = vlaneseq
      %v1585 = vshrl.u32 %v1584, 7
      %v1586 = vsub.s32 0, %v1585
      %v1587 = vrot.slane %v1570, %v1586
      %v1588 = vlaneseq
      %v1589 = vshrl.u32 %v1588, 7
      %v1590 = vsub.s32 0, %v1589
      %v1591 = vrot.slane %v1553, %v1590
      %v1592 = vlaneseq
      %v1593 = vshrl.u32 %v1592, 7
      %v1594 = vsub.s32 0, %v1593
      %v1595 = vrot.slane %v1567, %v1594
      %v1596 = vlaneseq
      %v1597 = vshrl.u32 %v1596, 7
      %v1598 = vsub.s32 0, %v1597
      %v1599 = vrot.slane %v1569, %v1598
      %v1600 = vlaneseq
      %v1601 = vshrl.u32 %v1600, 7
      %v1602 = vsub.s32 0, %v1601
      %v1603 = vrot.slane %v1571, %v1602
      %v1612 = vcombine.high %v496, %v496
      %v1614 = vunpack.c.l.s4 1983009808
      %v1615 = vunpack.c.0.s8 %v1614
      %v1616 = vlaneseq
      %v1617 = vshrl.u32 %v1616, 7
      %v1618 = vsub.s32 %v1615, %v1617
      %v1619 = vrot.slane %v496, %v1618
      %v1621 = vunpack.c.l.s4 1983009808
      %v1622 = vunpack.c.0.s8 %v1621
      %v1623 = vlaneseq
      %v1624 = vshrl.u32 %v1623, 7
      %v1625 = vsub.s32 %v1622, %v1624
      %v1626 = vrot.slane %v1612, %v1625
      %v1627 = vcombine.high %v1619, %v1619
      %v1628 = vcombine.high %v1626, %v1626
      %v1629 = vcombine.high %v499, %v499
      %v1631 = vunpack.c.l.s4 1983009808
      %v1632 = vunpack.c.0.s8 %v1631
      %v1633 = vlaneseq
      %v1634 = vshrl.u32 %v1633, 7
      %v1635 = vsub.s32 %v1632, %v1634
      %v1636 = vrot.slane %v499, %v1635
      %v1638 = vunpack.c.l.s4 1983009808
      %v1639 = vunpack.c.0.s8 %v1638
      %v1640 = vlaneseq
      %v1641 = vshrl.u32 %v1640, 7
      %v1642 = vsub.s32 %v1639, %v1641
      %v1643 = vrot.slane %v1629, %v1642
      %v1644 = vcombine.high %v1636, %v1636
      %v1645 = vcombine.high %v1643, %v1643
      %v1654 = vadd.f32 %v1575, %v1619
      %v1655 = vadd.f32 %v1579, %v1627
      %v1656 = vadd.f32 %v1583, %v1626
      %v1657 = vadd.f32 %v1587, %v1628
      %v1658 = vadd.f32 %v1591, %v1636
      %v1659 = vadd.f32 %v1595, %v1644
      %v1660 = vadd.f32 %v1599, %v1643
      %v1661 = vadd.f32 %v1603, %v1645
      %v1670 = vcombine.low %v1654, %v1654
      %v1671 = vcombine.low %v1655, %v1656
      %v1673 = vunpack.c.l.s4 1983009808
      %v1674 = vunpack.c.0.s8 %v1673
      %v1675 = vlaneseq
      %v1676 = vshrl.u32 %v1675, 7
      %v1677 = vsub.s32 %v1674, %v1676
      %v1678 = vrot.slane %v1670, %v1677
      %v1680 = vunpack.c.l.s4 1983009808
      %v1681 = vunpack.c.0.s8 %v1680
      %v1682 = vlaneseq
      %v1683 = vshrl.u32 %v1682, 7
      %v1684 = vsub.s32 %v1681, %v1683
      %v1685 = vrot.slane %v1671, %v1684
      %v1686 = vcombine.low %v1678, %v1685
      %v1687 = vcombine.low %v1657, %v1658
      %v1688 = vcombine.low %v1659, %v1660
      %v1690 = vunpack.c.l.s4 1983009808
      %v1691 = vunpack.c.0.s8 %v1690
      %v1692 = vlaneseq
      %v1693 = vshrl.u32 %v1692, 7
      %v1694 = vsub.s32 %v1691, %v1693
      %v1695 = vrot.slane %v1687, %v1694
      %v1697 = vunpack.c.l.s4 1983009808
      %v1698 = vunpack.c.0.s8 %v1697
      %v1699 = vlaneseq
      %v1700 = vshrl.u32 %v1699, 7
      %v1701 = vsub.s32 %v1698, %v1700
      %v1702 = vrot.slane %v1688, %v1701
      %v1703 = vcombine.low %v1695, %v1702
      %v1705 = vunpack.c.l.s4 1983009808
      %v1706 = vunpack.c.0.s8 %v1705
      %v1707 = vlaneseq
      %v1708 = vshrl.u32 %v1707, 7
      %v1709 = vsub.s32 %v1706, %v1708
      %v1710 = vrot.slane %v1661, %v1709
      %v1714 = vsel %vm457, 0.0, %v1686
      %v1715 = vsel %vm457, %v1710, 0.0
      %v1718 = vrot.slane %v1714, 1
      %v1719 = vrot.slane %v1703, 1
      %v1720 = vsel %vm514, %v1718, %v1719
      %v1721 = vrot.slane %v1715, 1
      %v1722 = vsel %vm514, %v1719, %v1721
      %1723 = vrot.lane.b32.xlu0 %v1720, 32
      %v1724 = vpop.permute.xlu0 %1723
      %1725 = vrot.lane.b32.xlu0 %v1722, 32
      %v1726 = vpop.permute.xlu0 %1725
      %v1729 = vrot.slane %v1714, 2
      %v1730 = vrot.slane %v1703, 2
      %v1731 = vsel %vm526, %v1729, %v1730
      %v1732 = vrot.slane %v1715, 2
      %v1733 = vsel %vm526, %v1730, %v1732
      %1734 = vrot.lane.b32.xlu0 %v1731, 64
      %v1735 = vpop.permute.xlu0 %1734
      %1736 = vrot.lane.b32.xlu0 %v1733, 64
      %v1737 = vpop.permute.xlu0 %1736
      %v1740 = vrot.slane %v1714, 3
      %v1741 = vrot.slane %v1703, 3
      %v1742 = vsel %vm538, %v1740, %v1741
      %v1743 = vrot.slane %v1715, 3
      %v1744 = vsel %vm538, %v1741, %v1743
      %1745 = vrot.lane.b32.xlu0 %v1742, 96
      %v1746 = vpop.permute.xlu0 %1745
      %1747 = vrot.lane.b32.xlu0 %v1744, 96
      %v1748 = vpop.permute.xlu0 %1747
      %v1751 = vrot.slane %v1714, 4
      %v1752 = vrot.slane %v1703, 4
      %v1753 = vsel %vm550, %v1751, %v1752
      %v1754 = vrot.slane %v1715, 4
      %v1755 = vsel %vm550, %v1752, %v1754
      %v1758 = vsel %vm558, %v1714, %v1724
      %v1759 = vsel %vm558, %v1703, %v1726
      %v1760 = vsel %vm561, %v1758, %v1735
      %v1761 = vsel %vm561, %v1759, %v1737
      %v1762 = vsel %vm564, %v1760, %v1746
      %v1763 = vsel %vm564, %v1761, %v1748
      %v1764 = vpack.c.bf16 %v1763, %v1762
      %v1765 = vpack.c.bf16 %v1755, %v1753
      %v1766 = vld [vmem:[%s11] sm:$0xf]
      %v1767 = vld [vmem:[%s11 + $0x4] sm:$0xf]
      %v1768 = vld [vmem:[%s11 + $0x8] sm:$0xf]
      %v1769 = vld [vmem:[%s11 + $0xc] sm:$0xf]
      %v1770 = vld [vmem:[%s11 + $0x10] sm:$0xf]
      %v1771 = vld [vmem:[%s11 + $0x14] sm:$0xf]
      %v1772 = vld [vmem:[%s11 + $0x18] sm:$0xf]
      %v1773 = vld [vmem:[%s11 + $0x1c] sm:$0xf]
      %v1774 = vld [vmem:[%s11 + $0x20] sm:$0xf]
      %v1775 = vld [vmem:[%s11 + $0x24] sm:$0xf]
      %v1776 = vld [vmem:[%s11 + $0x28] sm:$0xf]
      %v1777 = vld [vmem:[%s11 + $0x2c] sm:$0xf]
      %v1778 = vld [vmem:[%s11 + $0x30] sm:$0xf]
      %v1779 = vld [vmem:[%s11 + $0x34] sm:$0xf]
      %v1780 = vld [vmem:[%s11 + $0x38] sm:$0xf]
      %v1781 = vld [vmem:[%s11 + $0x3c] sm:$0xf]
      %v1782 = vld [vmem:[%s11 + $0x40] sm:$0xf]
      %v1783 = vld [vmem:[%s11 + $0x44] sm:$0xf]
      %v1784 = vld [vmem:[%s11 + $0x48] sm:$0xf]
      %v1785 = vld [vmem:[%s11 + $0x4c] sm:$0xf]
      %v1786 = vld [vmem:[%s12] sm:$0x1]
      %v1788 = vlaneseq
      %v1789 = vshrl.u32 %v1788, 7
      %v1790 = vsub.s32 0, %v1789
      %v1791 = vrot.slane %v1786, %v1790
      %v1813 = vunpack.c.l.b16 %v1766
      %v1814 = vunpack.c.l.b16 %v1767
      %v1815 = vunpack.c.l.b16 %v1768
      %v1816 = vunpack.c.l.b16 %v1769
      %v1817 = vunpack.c.l.b16 %v1770
      %v1818 = vunpack.c.l.b16 %v1771
      %v1819 = vunpack.c.l.b16 %v1772
      %v1820 = vunpack.c.l.b16 %v1773
      %v1821 = vunpack.c.l.b16 %v1774
      %v1822 = vunpack.c.l.b16 %v1775
      %v1823 = vunpack.c.l.b16 %v1776
      %v1824 = vunpack.c.l.b16 %v1777
      %v1825 = vunpack.c.l.b16 %v1778
      %v1826 = vunpack.c.l.b16 %v1779
      %v1827 = vunpack.c.l.b16 %v1780
      %v1828 = vunpack.c.l.b16 %v1781
      %v1829 = vunpack.c.l.b16 %v1782
      %v1830 = vunpack.c.l.b16 %v1783
      %v1831 = vunpack.c.l.b16 %v1784
      %v1832 = vunpack.c.l.b16 %v1785
      %v1833 = vpack.c.b16 %v1814, %v1813
      %v1834 = vpack.c.b16 %v1816, %v1815
      %v1835 = vpack.c.b16 %v1818, %v1817
      %v1836 = vpack.c.b16 %v1820, %v1819
      %v1837 = vpack.c.b16 %v1822, %v1821
      %v1838 = vpack.c.b16 %v1824, %v1823
      %v1839 = vpack.c.b16 %v1826, %v1825
      %v1840 = vpack.c.b16 %v1828, %v1827
      %v1841 = vpack.c.b16 %v1830, %v1829
      %v1842 = vpack.c.b16 %v1832, %v1831
      %v1854 = vsel %vm558, %v1765, 0
      %1856 = vmatprep.subr.bf16.mxu0 0
      %1857 = vmatpush1.bf16.msra.mxu0 %v1833
      %1858 = vmatprep.subr.bf16.mxu0 0
      %1859 = vmatpush1.bf16.msra.mxu0 %v1834
      %1860 = vmatprep.subr.bf16.mxu0 0
      %1861 = vmatpush1.bf16.msra.mxu0 %v1835
      %1862 = vmatprep.subr.bf16.mxu0 0
      %1863 = vmatpush1.bf16.msra.mxu0 %v1836
      %1864 = vmatprep.subr.bf16.mxu0 0
      %1865 = vmatpush1.bf16.msra.mxu0 %v1837
      %1866 = vmatprep.subr.bf16.mxu0 0
      %1867 = vmatpush1.bf16.msra.mxu0 %v1838
      %1868 = vmatprep.subr.bf16.mxu0 0
      %1869 = vmatpush1.bf16.msra.mxu0 %v1839
      %1870 = vmatprep.subr.bf16.mxu0 0
      %1871 = vmatpush1.bf16.msra.mxu0 %v1840
      %1872 = vmatprep.subr.bf16.mxu0 0
      %1873 = vmatpush1.bf16.msra.mxu0 %v1841
      %1874 = vmatprep.subr.bf16.mxu0 0
      %1875 = vmatpush1.bf16.msra.mxu0 %v1842
      %1876 = vmatprep.subr.bf16.mxu0 0
      %1877 = vmatpush1.bf16.msra.mxu0 0
      %1878 = vmatprep.subr.bf16.mxu0 0
      %1879 = vmatpush1.bf16.msra.mxu0 0
      %1880 = vmatprep.subr.bf16.mxu0 0
      %1881 = vmatpush1.bf16.msra.mxu0 0
      %1882 = vmatprep.subr.bf16.mxu0 0
      %1883 = vmatpush1.bf16.msra.mxu0 0
      %1884 = vmatprep.subr.bf16.mxu0 0
      %1885 = vmatpush1.bf16.msra.mxu0 0
      %1886 = vmatprep.subr.bf16.mxu0 0
      %1887 = vmatpush1.bf16.msra.mxu0 0
      %1888 = vmatprep.mubr.bf16.mxu0 %v1854
      %1889 = vmatmul.mubr.bf16.gmra.mrb[0].mxu0 %v1764
      %v1890 = vpop.f32.mrb[0].mxu0
      %v1891 = vadd.f32 %v1791, %v1890
      %v1892 = vpop.f32.mrb[0].mxu0
      %v1893 = vpop.f32.mrb[0].mxu0
      %v1894 = vadd.f32 %v1791, %v1893
      %v1895 = vpop.f32.mrb[0].mxu0
      %1896 = vdwg.mxu0
      %v1897 = vxor.u32 %v1891, 2147483648
      %v1898 = vxor.u32 %v1894, 2147483648
      %v1899 = vmul.f32 %v1897, 1.442695
      %v1900 = vpow.pop %v1899
      %v1901 = vmul.f32 %v1898, 1.442695
      %v1902 = vpow.pop %v1901
      %v1903 = vadd.f32 %v1900, 1.0
      %v1904 = vadd.f32 %v1902, 1.0
      %v1905 = vrcp.pop %v1903
      %v1906 = vmul.f32 1.0, %v1905
      %v1907 = vrcp.pop %v1904
      %v1908 = vmul.f32 1.0, %v1907
      %1909 = vst.msk [vmem:[%s440] sm:$0xff] %vm453, %v1906
      %1910 = vst.msk [vmem:[%s440 + $0x8] sm:$0xff] %vm453, %v1908
      %p1911 = scmp.lt.s32.totalorder %s24, 1
      %s1912 = scalar_select %p1911, %s24, 1
      %s1913 = smul.addr %s1912, 2
      %s1914 = smul.addr %s1913, 8
      %s1915 = scalar_lea.vmem %s13, %s1914
      // Predicated region
      $region73: #{tpu_custom_call.1} parent=71 // pred_check
        %p1916 = pneg %p320
      $region74: #{tpu_custom_call.1} parent=71 // pred_check_branch
        %1918 = sbr.rel (%p1916) target = $region76
      $region75: #{tpu_custom_call.1} parent=71 // pred_region
        _
      $region76: #{tpu_custom_call.1} parent=71 // pred_fallthru
        _
    $region72: #{tpu_custom_call.1} parent=5 // pred_fallthru
      _
    %p1919 = scmp.le.s32.totalorder 2, %s19
    // Predicated region
    $region77: #{tpu_custom_call.1} parent=5 // pred_check
      %p1920 = pneg %p1919
    $region78: #{tpu_custom_call.1} parent=5 // pred_check_branch
      %1922 = sbr.rel (%p1920) target = $region80
    $region79: #{tpu_custom_call.1} parent=5 // pred_region
      %s1923 = ssub.s32 %s19, 2
      // Predicated region
      $region81: #{tpu_custom_call.1} parent=79 // pred_check
        %p1924 = pneg %p326
      $region82: #{tpu_custom_call.1} parent=79 // pred_check_branch
        %1926 = sbr.rel (%p1924) target = $region84
      $region83: #{tpu_custom_call.1} parent=79 // pred_region
        %p1927 = scmp.lt.s32.totalorder %s25, 1
        %s1928 = scalar_select %p1927, %s25, 1
        %s1929 = smul.addr %s1928, 2
        %s1930 = smul.addr %s1929, 8
        %s1931 = scalar_lea.vmem %s13, %s1930
      $region84: #{tpu_custom_call.1} parent=79 // pred_fallthru
        _
    $region80: #{tpu_custom_call.1} parent=5 // pred_fallthru
      _
  $region6: #{tpu_custom_call.1} parent=0 // loop_footer
    %s23 = sadd.s32 1, %s19
  $region7: #{tpu_custom_call.1} parent=0 // loop_footer_branch
    %18 = sbr.rel target = $region3
  $region8: #{tpu_custom_call.1} parent=0 // loop_exit
    _

</llo_original>
